<compile_context>
chip_gen: v6e
topology: v6e:2x2x1
jax: 0.10.0
libtpu: 0.0.40
codegen_flags: <defaults>
</compile_context>

<pallas_src>
import functools

import jax
import jax.numpy as jnp
from jax import lax
from jax.experimental import pallas as pl
from jax.experimental.pallas import tpu as pltpu


def _attention_kernel(x_ref, wqkv_ref, bqkv_ref, wproj_ref, bproj_ref, o_ref,
                      heads_ref, *,
                      batch_tile: int, n_tokens: int, n_tokens_padded: int,
                      n_heads: int, per_head_dim: int, scale: float,
                      compute_dtype):
    """One grid step processes `batch_tile` batch elements.

    x_ref    : (Bt*Np, D)  compute_dtype tokens (rows n_tokens..Np-1 of each
                           batch element are zero padding)
    wqkv_ref : (D, 3*D)    compute_dtype qkv weight (stored [in,out] = torch W.T)
    bqkv_ref : (1, 3*D)    f32 qkv bias
    wproj_ref: (D, D)      compute_dtype output-projection weight ([in,out])
    bproj_ref: (1, D)      f32 output-projection bias
    o_ref    : (Bt*Np, D)  output
    heads_ref: (Bt*Np, D)  f32 VMEM scratch holding the concatenated heads
    """
    Np = n_tokens_padded
    hd = per_head_dim
    H = n_heads

    # Fused QKV projection over all Bt*Np rows at once (big-M MXU matmul).
    qkv = jnp.dot(x_ref[...], wqkv_ref[...],
                  preferred_element_type=jnp.float32) + bqkv_ref[...]

    # Concatenated-heads scratch; zeroed so padded token rows stay benign.
    heads_ref[...] = jnp.zeros_like(heads_ref)

    # Per (batch element, head) scaled dot-product attention. All slices are
    # static.  Torch's reshape(B,N,3,H,hd) layout means column
    # ((qkv_idx*H + h)*hd + d) of the fused projection belongs to head h.
    # TODO(synk): for per_head_dim < 128, pair heads / batch the attn@v matmul
    # so the MXU output lane width reaches 128 (perf review item 6).
    for b in range(batch_tile):
        row0 = b * Np
        for h in range(H):
            q = qkv[row0:row0 + n_tokens,
                    (0 * H + h) * hd:(0 * H + h + 1) * hd]
            k = qkv[row0:row0 + n_tokens,
                    (1 * H + h) * hd:(1 * H + h + 1) * hd]
            v = qkv[row0:row0 + n_tokens,
                    (2 * H + h) * hd:(2 * H + h + 1) * hd]

            # scores = scale * q @ k^T without materializing the transpose:
            # contract the last dims of both operands.
            scores = scale * lax.dot_general(
                q.astype(compute_dtype), k.astype(compute_dtype),
                dimension_numbers=(((1,), (1,)), ((), ())),
                preferred_element_type=jnp.float32)            # (N, N) f32

            # Numerically stable softmax, kept in f32; reciprocal on the EUP.
            m = jnp.max(scores, axis=-1, keepdims=True)
            e = jnp.exp(scores - m)
            denom = jnp.sum(e, axis=-1, keepdims=True)
            attn = e * pl.reciprocal(denom, approx=True)

            # Weighted average of values, written directly into the lane slice
            # of the VMEM scratch (bounds vreg live ranges, no concat).
            wavg = jnp.dot(attn.astype(compute_dtype),
                           v.astype(compute_dtype),
                           preferred_element_type=jnp.float32)  # (N, hd) f32
            heads_ref[row0:row0 + n_tokens, h * hd:(h + 1) * hd] = wavg

    # Output projection over all Bt*Np rows (padded rows just see the bias).
    out = jnp.dot(heads_ref[...].astype(compute_dtype), wproj_ref[...],
                  preferred_element_type=jnp.float32) + bproj_ref[...]
    o_ref[...] = out.astype(o_ref.dtype)


def _pick_batch_tile(B: int, n_tokens_padded: int, max_rows: int) -> int:
    """Largest divisor of B whose (Bt*Np, D) block stays within max_rows rows,
    while preferring >= 2 grid steps (v7x has 2 TensorCores)."""
    best = 1
    for bt in range(1, B + 1):
        if B % bt == 0 and bt * n_tokens_padded <= max_rows:
            best = bt
    if B > 1 and B // best < 2:
        for bt in range(best, 0, -1):
            if B % bt == 0 and B // bt >= 2:
                best = bt
                break
    return best


def attention_layer_pallas(embeddings, w_qkv, b_qkv, w_proj, b_proj,
                           n_heads: int, *,
                           compute_dtype=jnp.bfloat16,
                           max_block_rows: int = 512):
    """embeddings: (B, N, D). w_qkv: (D, 3D) [= torch W.T]. b_qkv: (3D,).
    w_proj: (D, D) [= torch W.T]. b_proj: (D,)."""
    B, N, D = embeddings.shape
    assert D % n_heads == 0, "dim must be divisible by n_heads"
    per_head_dim = D // n_heads
    scale = per_head_dim ** (-0.5)

    # Pad the token axis to a sublane multiple so the 2-D block (Bt*Np, D)
    # satisfies the (8, 128) block-shape rule, then flatten batch*tokens.
    Np = ((N + 7) // 8) * 8
    x = embeddings.astype(compute_dtype)
    if Np != N:
        x = jnp.pad(x, ((0, 0), (0, Np - N), (0, 0)))
    x2d = x.reshape(B * Np, D)

    Bt = _pick_batch_tile(B, Np, max_block_rows)
    grid = (B // Bt,)
    rows = Bt * Np

    w_qkv_c = w_qkv.astype(compute_dtype)
    w_proj_c = w_proj.astype(compute_dtype)
    b_qkv2 = b_qkv.reshape(1, 3 * D).astype(jnp.float32)
    b_proj2 = b_proj.reshape(1, D).astype(jnp.float32)

    kernel = functools.partial(
        _attention_kernel,
        batch_tile=Bt, n_tokens=N, n_tokens_padded=Np,
        n_heads=n_heads, per_head_dim=per_head_dim, scale=scale,
        compute_dtype=compute_dtype)

    # Rough VMEM footprint: double-buffered blocks + weights + scratch + slack.
    itemsize = jnp.dtype(compute_dtype).itemsize
    est = (2 * (rows * D * itemsize                    # x block
                + rows * D * 4                         # out block
                + D * 3 * D * itemsize                 # W_qkv
                + D * D * itemsize                     # W_proj
                + 4 * D * 4)                           # biases
           + rows * D * 4                              # heads scratch
           + 4 * rows * 3 * D * 4)                     # qkv / intermediates
    vmem_limit = int(min(48 * 1024 * 1024, max(8 * 1024 * 1024, 2 * est)))

    out2d = pl.pallas_call(
        kernel,
        out_shape=jax.ShapeDtypeStruct((B * Np, D), embeddings.dtype),
        grid_spec=pltpu.PrefetchScalarGridSpec(
            num_scalar_prefetch=0,
            grid=grid,
            in_specs=[
                pl.BlockSpec((rows, D), lambda i: (i, 0)),     # tokens
                pl.BlockSpec((D, 3 * D), lambda i: (0, 0)),    # W_qkv^T
                pl.BlockSpec((1, 3 * D), lambda i: (0, 0)),    # b_qkv
                pl.BlockSpec((D, D), lambda i: (0, 0)),        # W_proj^T
                pl.BlockSpec((1, D), lambda i: (0, 0)),        # b_proj
            ],
            out_specs=pl.BlockSpec((rows, D), lambda i: (i, 0)),
            scratch_shapes=[pltpu.VMEM((rows, D), jnp.float32)],
        ),
        compiler_params=pltpu.CompilerParams(
            dimension_semantics=("parallel",),
            vmem_limit_bytes=vmem_limit),
    )(x2d, w_qkv_c, b_qkv2, w_proj_c, b_proj2)

    return out2d.reshape(B, Np, D)[:, :N, :]


def attention_layer_ref(embeddings, w_qkv, b_qkv, w_proj, b_proj, n_heads):
    """Pure-JAX f32 reference mirroring the PyTorch forward exactly."""
    B, N, D = embeddings.shape
    hd = D // n_heads
    scale = hd ** (-0.5)
    qkv = embeddings @ w_qkv + b_qkv                              # (B, N, 3D)
    qkv = qkv.reshape(B, N, 3, n_heads, hd).transpose(2, 0, 3, 1, 4)
    q, k, v = qkv[0], qkv[1], qkv[2]                              # (B, H, N, hd)
    dot = scale * jnp.einsum("bhnd,bhmd->bhnm", q, k)
    attn = jax.nn.softmax(dot, axis=-1)
    wavg = jnp.einsum("bhnm,bhmd->bhnd", attn, v)                 # (B, H, N, hd)
    wavg = wavg.transpose(0, 2, 1, 3).reshape(B, N, D)
    return wavg @ w_proj + b_proj


if __name__ == "__main__":
    key = jax.random.PRNGKey(0)

    # Module hyper-params (small, consistent with the forward contract).
    B = 4
    n_patches = 8
    N = n_patches + 1        # +1 for the class token
    dim = 32
    n_heads = 4
    qkv_bias = True          # bias included; set b_qkv to zeros if False

    k1, k2, k3, k4, k5 = jax.random.split(key, 5)
    embeddings = jax.random.normal(k1, (B, N, dim), dtype=jnp.float32)

    # Deterministic parameter init (stored as [in, out], i.e. torch W.T).
    w_qkv = jax.random.normal(k2, (dim, 3 * dim), dtype=jnp.float32) * 0.02
    b_qkv = (jax.random.normal(k3, (3 * dim,), dtype=jnp.float32) * 0.02
             if qkv_bias else jnp.zeros((3 * dim,), jnp.float32))
    w_proj = jax.random.normal(k4, (dim, dim), dtype=jnp.float32) * 0.02
    b_proj = jax.random.normal(k5, (dim,), dtype=jnp.float32) * 0.02

    out = attention_layer_pallas(embeddings, w_qkv, b_qkv, w_proj, b_proj,
                                 n_heads=n_heads)
    out = jax.block_until_ready(out)

    ref = attention_layer_ref(embeddings, w_qkv, b_qkv, w_proj, b_proj, n_heads)
    assert out.shape == (B, N, dim)
    # bf16 MXU operands + approx reciprocal -> looser tolerance vs f32 ref.
    assert jnp.allclose(out, ref, atol=2e-2, rtol=2e-2), "mismatch vs reference"

    print("KERNEL_OK")
</pallas_src>

<mosaic_0001>
module attributes {stable_mosaic.version = 11 : i64} {
  func.func @_attention_kernel(%arg0: i32, %arg1: memref<32x32xbf16, #tpu.memory_space<vmem>>, %arg2: memref<32x96xbf16, #tpu.memory_space<vmem>>, %arg3: memref<1x96xf32, #tpu.memory_space<vmem>>, %arg4: memref<32x32xbf16, #tpu.memory_space<vmem>>, %arg5: memref<1x32xf32, #tpu.memory_space<vmem>>, %arg6: memref<32x32xf32, #tpu.memory_space<vmem>>, %arg7: memref<32x32xf32, #tpu.memory_space<vmem>>) attributes {dimension_semantics = [#tpu.dimension_semantics<parallel>], iteration_bounds = array<i64: 2>, scalar_prefetch = 0 : i64, scratch_operands = 1 : i64, tpu.core_type = #tpu.core_type<tc>, window_params = [{transform_indices = @transform_0, window_bounds = array<i64: 32, 32>}, {pipeline_mode = #tpu.pipeline_mode<synchronous>, transform_indices = @transform_1, window_bounds = array<i64: 32, 96>}, {pipeline_mode = #tpu.pipeline_mode<synchronous>, transform_indices = @transform_2, window_bounds = array<i64: 1, 96>}, {pipeline_mode = #tpu.pipeline_mode<synchronous>, transform_indices = @transform_3, window_bounds = array<i64: 32, 32>}, {pipeline_mode = #tpu.pipeline_mode<synchronous>, transform_indices = @transform_4, window_bounds = array<i64: 1, 32>}, {transform_indices = @transform_5, window_bounds = array<i64: 32, 32>}]} {
    %c0 = arith.constant 0 : index
    %c0_0 = arith.constant 0 : index
    %0 = vector.load %arg1[%c0, %c0_0] : memref<32x32xbf16, #tpu.memory_space<vmem>>, vector<32x32xbf16>
    %c0_1 = arith.constant 0 : index
    %c0_2 = arith.constant 0 : index
    %1 = vector.load %arg2[%c0_1, %c0_2] : memref<32x96xbf16, #tpu.memory_space<vmem>>, vector<32x96xbf16>
    %cst = arith.constant dense<0.000000e+00> : vector<32x96xf32>
    %2 = tpu.matmul %0, %1, %cst {dimension_numbers = #tpu.dot_dimension_numbers<[1], [0], [0], [1], [0, 0, 1, 1], [], []>} : vector<32x32xbf16>, vector<32x96xbf16>, vector<32x96xf32> -> vector<32x96xf32>
    %c0_3 = arith.constant 0 : index
    %c0_4 = arith.constant 0 : index
    %3 = vector.load %arg3[%c0_3, %c0_4] : memref<1x96xf32, #tpu.memory_space<vmem>>, vector<1x96xf32>
    %4 = vector.broadcast %3 : vector<1x96xf32> to vector<32x96xf32>
    %5 = arith.addf %2, %4 : vector<32x96xf32>
    %cst_5 = arith.constant 0.000000e+00 : f32
    %6 = vector.broadcast %cst_5 : f32 to vector<32x32xf32>
    %c0_6 = arith.constant 0 : index
    %c0_7 = arith.constant 0 : index
    %7 = vector.load %arg7[%c0_6, %c0_7] : memref<32x32xf32, #tpu.memory_space<vmem>>, vector<32x32xf32>
    tpu.vector_store %arg7[%c0_6, %c0_7], %6 {strides = array<i32>} : memref<32x32xf32, #tpu.memory_space<vmem>>, vector<32x32xf32>,
    %8 = vector.extract_strided_slice %5 {offsets = [0, 0], sizes = [9, 8], strides = [1, 1]} : vector<32x96xf32> to vector<9x8xf32>
    %9 = vector.extract_strided_slice %5 {offsets = [0, 32], sizes = [9, 8], strides = [1, 1]} : vector<32x96xf32> to vector<9x8xf32>
    %10 = vector.extract_strided_slice %5 {offsets = [0, 64], sizes = [9, 8], strides = [1, 1]} : vector<32x96xf32> to vector<9x8xf32>
    %11 = arith.truncf %8 : vector<9x8xf32> to vector<9x8xbf16>
    %12 = arith.truncf %9 : vector<9x8xf32> to vector<9x8xbf16>
    %cst_8 = arith.constant dense<0.000000e+00> : vector<9x9xf32>
    %13 = tpu.matmul %11, %12, %cst_8 {dimension_numbers = #tpu.dot_dimension_numbers<[1], [1], [0], [0], [0, 0, 1, 0], [], []>} : vector<9x8xbf16>, vector<9x8xbf16>, vector<9x9xf32> -> vector<9x9xf32>
    %cst_9 = arith.constant 0.353553385 : f32
    %14 = vector.broadcast %cst_9 : f32 to vector<9x9xf32>
    %15 = arith.mulf %14, %13 : vector<9x9xf32>
    %cst_10 = arith.constant dense<0xFF800000> : vector<9xf32>
    %16 = vector.multi_reduction <maximumf>, %15, %cst_10 [1] : vector<9x9xf32> to vector<9xf32>
    %17 = vector.shape_cast %16 : vector<9xf32> to vector<9x1xf32>
    %18 = vector.broadcast %17 : vector<9x1xf32> to vector<9x9xf32>
    %19 = arith.subf %15, %18 : vector<9x9xf32>
    %20 = math.exp %19 : vector<9x9xf32>
    %cst_11 = arith.constant dense<0.000000e+00> : vector<9xf32>
    %21 = vector.multi_reduction <add>, %20, %cst_11 [1] : vector<9x9xf32> to vector<9xf32>
    %22 = vector.shape_cast %21 : vector<9xf32> to vector<9x1xf32>
    %23 = tpu.reciprocal %22 {approx = true} : vector<9x1xf32> -> vector<9x1xf32>
    %24 = vector.broadcast %23 : vector<9x1xf32> to vector<9x9xf32>
    %25 = arith.mulf %20, %24 : vector<9x9xf32>
    %26 = arith.truncf %25 : vector<9x9xf32> to vector<9x9xbf16>
    %27 = arith.truncf %10 : vector<9x8xf32> to vector<9x8xbf16>
    %cst_12 = arith.constant dense<0.000000e+00> : vector<9x8xf32>
    %28 = tpu.matmul %26, %27, %cst_12 {dimension_numbers = #tpu.dot_dimension_numbers<[1], [0], [0], [1], [0, 0, 1, 1], [], []>} : vector<9x9xbf16>, vector<9x8xbf16>, vector<9x8xf32> -> vector<9x8xf32>
    %c0_13 = arith.constant 0 : index
    %c0_14 = arith.constant 0 : index
    %29 = vector.load %arg7[%c0_13, %c0_14] : memref<32x32xf32, #tpu.memory_space<vmem>>, vector<9x8xf32>
    tpu.vector_store %arg7[%c0_13, %c0_14], %28 {strides = array<i32>} : memref<32x32xf32, #tpu.memory_space<vmem>>, vector<9x8xf32>,
    %30 = vector.extract_strided_slice %5 {offsets = [0, 8], sizes = [9, 8], strides = [1, 1]} : vector<32x96xf32> to vector<9x8xf32>
    %31 = vector.extract_strided_slice %5 {offsets = [0, 40], sizes = [9, 8], strides = [1, 1]} : vector<32x96xf32> to vector<9x8xf32>
    %32 = vector.extract_strided_slice %5 {offsets = [0, 72], sizes = [9, 8], strides = [1, 1]} : vector<32x96xf32> to vector<9x8xf32>
    %33 = arith.truncf %30 : vector<9x8xf32> to vector<9x8xbf16>
    %34 = arith.truncf %31 : vector<9x8xf32> to vector<9x8xbf16>
    %cst_15 = arith.constant dense<0.000000e+00> : vector<9x9xf32>
    %35 = tpu.matmul %33, %34, %cst_15 {dimension_numbers = #tpu.dot_dimension_numbers<[1], [1], [0], [0], [0, 0, 1, 0], [], []>} : vector<9x8xbf16>, vector<9x8xbf16>, vector<9x9xf32> -> vector<9x9xf32>
    %cst_16 = arith.constant 0.353553385 : f32
    %36 = vector.broadcast %cst_16 : f32 to vector<9x9xf32>
    %37 = arith.mulf %36, %35 : vector<9x9xf32>
    %cst_17 = arith.constant dense<0xFF800000> : vector<9xf32>
    %38 = vector.multi_reduction <maximumf>, %37, %cst_17 [1] : vector<9x9xf32> to vector<9xf32>
    %39 = vector.shape_cast %38 : vector<9xf32> to vector<9x1xf32>
    %40 = vector.broadcast %39 : vector<9x1xf32> to vector<9x9xf32>
    %41 = arith.subf %37, %40 : vector<9x9xf32>
    %42 = math.exp %41 : vector<9x9xf32>
    %cst_18 = arith.constant dense<0.000000e+00> : vector<9xf32>
    %43 = vector.multi_reduction <add>, %42, %cst_18 [1] : vector<9x9xf32> to vector<9xf32>
    %44 = vector.shape_cast %43 : vector<9xf32> to vector<9x1xf32>
    %45 = tpu.reciprocal %44 {approx = true} : vector<9x1xf32> -> vector<9x1xf32>
    %46 = vector.broadcast %45 : vector<9x1xf32> to vector<9x9xf32>
    %47 = arith.mulf %42, %46 : vector<9x9xf32>
    %48 = arith.truncf %47 : vector<9x9xf32> to vector<9x9xbf16>
    %49 = arith.truncf %32 : vector<9x8xf32> to vector<9x8xbf16>
    %cst_19 = arith.constant dense<0.000000e+00> : vector<9x8xf32>
    %50 = tpu.matmul %48, %49, %cst_19 {dimension_numbers = #tpu.dot_dimension_numbers<[1], [0], [0], [1], [0, 0, 1, 1], [], []>} : vector<9x9xbf16>, vector<9x8xbf16>, vector<9x8xf32> -> vector<9x8xf32>
    %c0_20 = arith.constant 0 : index
    %c8 = arith.constant 8 : index
    %51 = vector.load %arg7[%c0_20, %c8] : memref<32x32xf32, #tpu.memory_space<vmem>>, vector<9x8xf32>
    tpu.vector_store %arg7[%c0_20, %c8], %50 {strides = array<i32>} : memref<32x32xf32, #tpu.memory_space<vmem>>, vector<9x8xf32>,
    %52 = vector.extract_strided_slice %5 {offsets = [0, 16], sizes = [9, 8], strides = [1, 1]} : vector<32x96xf32> to vector<9x8xf32>
    %53 = vector.extract_strided_slice %5 {offsets = [0, 48], sizes = [9, 8], strides = [1, 1]} : vector<32x96xf32> to vector<9x8xf32>
    %54 = vector.extract_strided_slice %5 {offsets = [0, 80], sizes = [9, 8], strides = [1, 1]} : vector<32x96xf32> to vector<9x8xf32>
    %55 = arith.truncf %52 : vector<9x8xf32> to vector<9x8xbf16>
    %56 = arith.truncf %53 : vector<9x8xf32> to vector<9x8xbf16>
    %cst_21 = arith.constant dense<0.000000e+00> : vector<9x9xf32>
    %57 = tpu.matmul %55, %56, %cst_21 {dimension_numbers = #tpu.dot_dimension_numbers<[1], [1], [0], [0], [0, 0, 1, 0], [], []>} : vector<9x8xbf16>, vector<9x8xbf16>, vector<9x9xf32> -> vector<9x9xf32>
    %cst_22 = arith.constant 0.353553385 : f32
    %58 = vector.broadcast %cst_22 : f32 to vector<9x9xf32>
    %59 = arith.mulf %58, %57 : vector<9x9xf32>
    %cst_23 = arith.constant dense<0xFF800000> : vector<9xf32>
    %60 = vector.multi_reduction <maximumf>, %59, %cst_23 [1] : vector<9x9xf32> to vector<9xf32>
    %61 = vector.shape_cast %60 : vector<9xf32> to vector<9x1xf32>
    %62 = vector.broadcast %61 : vector<9x1xf32> to vector<9x9xf32>
    %63 = arith.subf %59, %62 : vector<9x9xf32>
    %64 = math.exp %63 : vector<9x9xf32>
    %cst_24 = arith.constant dense<0.000000e+00> : vector<9xf32>
    %65 = vector.multi_reduction <add>, %64, %cst_24 [1] : vector<9x9xf32> to vector<9xf32>
    %66 = vector.shape_cast %65 : vector<9xf32> to vector<9x1xf32>
    %67 = tpu.reciprocal %66 {approx = true} : vector<9x1xf32> -> vector<9x1xf32>
    %68 = vector.broadcast %67 : vector<9x1xf32> to vector<9x9xf32>
    %69 = arith.mulf %64, %68 : vector<9x9xf32>
    %70 = arith.truncf %69 : vector<9x9xf32> to vector<9x9xbf16>
    %71 = arith.truncf %54 : vector<9x8xf32> to vector<9x8xbf16>
    %cst_25 = arith.constant dense<0.000000e+00> : vector<9x8xf32>
    %72 = tpu.matmul %70, %71, %cst_25 {dimension_numbers = #tpu.dot_dimension_numbers<[1], [0], [0], [1], [0, 0, 1, 1], [], []>} : vector<9x9xbf16>, vector<9x8xbf16>, vector<9x8xf32> -> vector<9x8xf32>
    %c0_26 = arith.constant 0 : index
    %c16 = arith.constant 16 : index
    %73 = vector.load %arg7[%c0_26, %c16] : memref<32x32xf32, #tpu.memory_space<vmem>>, vector<9x8xf32>
    tpu.vector_store %arg7[%c0_26, %c16], %72 {strides = array<i32>} : memref<32x32xf32, #tpu.memory_space<vmem>>, vector<9x8xf32>,
    %74 = vector.extract_strided_slice %5 {offsets = [0, 24], sizes = [9, 8], strides = [1, 1]} : vector<32x96xf32> to vector<9x8xf32>
    %75 = vector.extract_strided_slice %5 {offsets = [0, 56], sizes = [9, 8], strides = [1, 1]} : vector<32x96xf32> to vector<9x8xf32>
    %76 = vector.extract_strided_slice %5 {offsets = [0, 88], sizes = [9, 8], strides = [1, 1]} : vector<32x96xf32> to vector<9x8xf32>
    %77 = arith.truncf %74 : vector<9x8xf32> to vector<9x8xbf16>
    %78 = arith.truncf %75 : vector<9x8xf32> to vector<9x8xbf16>
    %cst_27 = arith.constant dense<0.000000e+00> : vector<9x9xf32>
    %79 = tpu.matmul %77, %78, %cst_27 {dimension_numbers = #tpu.dot_dimension_numbers<[1], [1], [0], [0], [0, 0, 1, 0], [], []>} : vector<9x8xbf16>, vector<9x8xbf16>, vector<9x9xf32> -> vector<9x9xf32>
    %cst_28 = arith.constant 0.353553385 : f32
    %80 = vector.broadcast %cst_28 : f32 to vector<9x9xf32>
    %81 = arith.mulf %80, %79 : vector<9x9xf32>
    %cst_29 = arith.constant dense<0xFF800000> : vector<9xf32>
    %82 = vector.multi_reduction <maximumf>, %81, %cst_29 [1] : vector<9x9xf32> to vector<9xf32>
    %83 = vector.shape_cast %82 : vector<9xf32> to vector<9x1xf32>
    %84 = vector.broadcast %83 : vector<9x1xf32> to vector<9x9xf32>
    %85 = arith.subf %81, %84 : vector<9x9xf32>
    %86 = math.exp %85 : vector<9x9xf32>
    %cst_30 = arith.constant dense<0.000000e+00> : vector<9xf32>
    %87 = vector.multi_reduction <add>, %86, %cst_30 [1] : vector<9x9xf32> to vector<9xf32>
    %88 = vector.shape_cast %87 : vector<9xf32> to vector<9x1xf32>
    %89 = tpu.reciprocal %88 {approx = true} : vector<9x1xf32> -> vector<9x1xf32>
    %90 = vector.broadcast %89 : vector<9x1xf32> to vector<9x9xf32>
    %91 = arith.mulf %86, %90 : vector<9x9xf32>
    %92 = arith.truncf %91 : vector<9x9xf32> to vector<9x9xbf16>
    %93 = arith.truncf %76 : vector<9x8xf32> to vector<9x8xbf16>
    %cst_31 = arith.constant dense<0.000000e+00> : vector<9x8xf32>
    %94 = tpu.matmul %92, %93, %cst_31 {dimension_numbers = #tpu.dot_dimension_numbers<[1], [0], [0], [1], [0, 0, 1, 1], [], []>} : vector<9x9xbf16>, vector<9x8xbf16>, vector<9x8xf32> -> vector<9x8xf32>
    %c0_32 = arith.constant 0 : index
    %c24 = arith.constant 24 : index
    %95 = vector.load %arg7[%c0_32, %c24] : memref<32x32xf32, #tpu.memory_space<vmem>>, vector<9x8xf32>
    tpu.vector_store %arg7[%c0_32, %c24], %94 {strides = array<i32>} : memref<32x32xf32, #tpu.memory_space<vmem>>, vector<9x8xf32>,
    %96 = vector.extract_strided_slice %5 {offsets = [16, 0], sizes = [9, 8], strides = [1, 1]} : vector<32x96xf32> to vector<9x8xf32>
    %97 = vector.extract_strided_slice %5 {offsets = [16, 32], sizes = [9, 8], strides = [1, 1]} : vector<32x96xf32> to vector<9x8xf32>
    %98 = vector.extract_strided_slice %5 {offsets = [16, 64], sizes = [9, 8], strides = [1, 1]} : vector<32x96xf32> to vector<9x8xf32>
    %99 = arith.truncf %96 : vector<9x8xf32> to vector<9x8xbf16>
    %100 = arith.truncf %97 : vector<9x8xf32> to vector<9x8xbf16>
    %cst_33 = arith.constant dense<0.000000e+00> : vector<9x9xf32>
    %101 = tpu.matmul %99, %100, %cst_33 {dimension_numbers = #tpu.dot_dimension_numbers<[1], [1], [0], [0], [0, 0, 1, 0], [], []>} : vector<9x8xbf16>, vector<9x8xbf16>, vector<9x9xf32> -> vector<9x9xf32>
    %cst_34 = arith.constant 0.353553385 : f32
    %102 = vector.broadcast %cst_34 : f32 to vector<9x9xf32>
    %103 = arith.mulf %102, %101 : vector<9x9xf32>
    %cst_35 = arith.constant dense<0xFF800000> : vector<9xf32>
    %104 = vector.multi_reduction <maximumf>, %103, %cst_35 [1] : vector<9x9xf32> to vector<9xf32>
    %105 = vector.shape_cast %104 : vector<9xf32> to vector<9x1xf32>
    %106 = vector.broadcast %105 : vector<9x1xf32> to vector<9x9xf32>
    %107 = arith.subf %103, %106 : vector<9x9xf32>
    %108 = math.exp %107 : vector<9x9xf32>
    %cst_36 = arith.constant dense<0.000000e+00> : vector<9xf32>
    %109 = vector.multi_reduction <add>, %108, %cst_36 [1] : vector<9x9xf32> to vector<9xf32>
    %110 = vector.shape_cast %109 : vector<9xf32> to vector<9x1xf32>
    %111 = tpu.reciprocal %110 {approx = true} : vector<9x1xf32> -> vector<9x1xf32>
    %112 = vector.broadcast %111 : vector<9x1xf32> to vector<9x9xf32>
    %113 = arith.mulf %108, %112 : vector<9x9xf32>
    %114 = arith.truncf %113 : vector<9x9xf32> to vector<9x9xbf16>
    %115 = arith.truncf %98 : vector<9x8xf32> to vector<9x8xbf16>
    %cst_37 = arith.constant dense<0.000000e+00> : vector<9x8xf32>
    %116 = tpu.matmul %114, %115, %cst_37 {dimension_numbers = #tpu.dot_dimension_numbers<[1], [0], [0], [1], [0, 0, 1, 1], [], []>} : vector<9x9xbf16>, vector<9x8xbf16>, vector<9x8xf32> -> vector<9x8xf32>
    %c16_38 = arith.constant 16 : index
    %c0_39 = arith.constant 0 : index
    %117 = vector.load %arg7[%c16_38, %c0_39] : memref<32x32xf32, #tpu.memory_space<vmem>>, vector<9x8xf32>
    tpu.vector_store %arg7[%c16_38, %c0_39], %116 {strides = array<i32>} : memref<32x32xf32, #tpu.memory_space<vmem>>, vector<9x8xf32>,
    %118 = vector.extract_strided_slice %5 {offsets = [16, 8], sizes = [9, 8], strides = [1, 1]} : vector<32x96xf32> to vector<9x8xf32>
    %119 = vector.extract_strided_slice %5 {offsets = [16, 40], sizes = [9, 8], strides = [1, 1]} : vector<32x96xf32> to vector<9x8xf32>
    %120 = vector.extract_strided_slice %5 {offsets = [16, 72], sizes = [9, 8], strides = [1, 1]} : vector<32x96xf32> to vector<9x8xf32>
    %121 = arith.truncf %118 : vector<9x8xf32> to vector<9x8xbf16>
    %122 = arith.truncf %119 : vector<9x8xf32> to vector<9x8xbf16>
    %cst_40 = arith.constant dense<0.000000e+00> : vector<9x9xf32>
    %123 = tpu.matmul %121, %122, %cst_40 {dimension_numbers = #tpu.dot_dimension_numbers<[1], [1], [0], [0], [0, 0, 1, 0], [], []>} : vector<9x8xbf16>, vector<9x8xbf16>, vector<9x9xf32> -> vector<9x9xf32>
    %cst_41 = arith.constant 0.353553385 : f32
    %124 = vector.broadcast %cst_41 : f32 to vector<9x9xf32>
    %125 = arith.mulf %124, %123 : vector<9x9xf32>
    %cst_42 = arith.constant dense<0xFF800000> : vector<9xf32>
    %126 = vector.multi_reduction <maximumf>, %125, %cst_42 [1] : vector<9x9xf32> to vector<9xf32>
    %127 = vector.shape_cast %126 : vector<9xf32> to vector<9x1xf32>
    %128 = vector.broadcast %127 : vector<9x1xf32> to vector<9x9xf32>
    %129 = arith.subf %125, %128 : vector<9x9xf32>
    %130 = math.exp %129 : vector<9x9xf32>
    %cst_43 = arith.constant dense<0.000000e+00> : vector<9xf32>
    %131 = vector.multi_reduction <add>, %130, %cst_43 [1] : vector<9x9xf32> to vector<9xf32>
    %132 = vector.shape_cast %131 : vector<9xf32> to vector<9x1xf32>
    %133 = tpu.reciprocal %132 {approx = true} : vector<9x1xf32> -> vector<9x1xf32>
    %134 = vector.broadcast %133 : vector<9x1xf32> to vector<9x9xf32>
    %135 = arith.mulf %130, %134 : vector<9x9xf32>
    %136 = arith.truncf %135 : vector<9x9xf32> to vector<9x9xbf16>
    %137 = arith.truncf %120 : vector<9x8xf32> to vector<9x8xbf16>
    %cst_44 = arith.constant dense<0.000000e+00> : vector<9x8xf32>
    %138 = tpu.matmul %136, %137, %cst_44 {dimension_numbers = #tpu.dot_dimension_numbers<[1], [0], [0], [1], [0, 0, 1, 1], [], []>} : vector<9x9xbf16>, vector<9x8xbf16>, vector<9x8xf32> -> vector<9x8xf32>
    %c16_45 = arith.constant 16 : index
    %c8_46 = arith.constant 8 : index
    %139 = vector.load %arg7[%c16_45, %c8_46] : memref<32x32xf32, #tpu.memory_space<vmem>>, vector<9x8xf32>
    tpu.vector_store %arg7[%c16_45, %c8_46], %138 {strides = array<i32>} : memref<32x32xf32, #tpu.memory_space<vmem>>, vector<9x8xf32>,
    %140 = vector.extract_strided_slice %5 {offsets = [16, 16], sizes = [9, 8], strides = [1, 1]} : vector<32x96xf32> to vector<9x8xf32>
    %141 = vector.extract_strided_slice %5 {offsets = [16, 48], sizes = [9, 8], strides = [1, 1]} : vector<32x96xf32> to vector<9x8xf32>
    %142 = vector.extract_strided_slice %5 {offsets = [16, 80], sizes = [9, 8], strides = [1, 1]} : vector<32x96xf32> to vector<9x8xf32>
    %143 = arith.truncf %140 : vector<9x8xf32> to vector<9x8xbf16>
    %144 = arith.truncf %141 : vector<9x8xf32> to vector<9x8xbf16>
    %cst_47 = arith.constant dense<0.000000e+00> : vector<9x9xf32>
    %145 = tpu.matmul %143, %144, %cst_47 {dimension_numbers = #tpu.dot_dimension_numbers<[1], [1], [0], [0], [0, 0, 1, 0], [], []>} : vector<9x8xbf16>, vector<9x8xbf16>, vector<9x9xf32> -> vector<9x9xf32>
    %cst_48 = arith.constant 0.353553385 : f32
    %146 = vector.broadcast %cst_48 : f32 to vector<9x9xf32>
    %147 = arith.mulf %146, %145 : vector<9x9xf32>
    %cst_49 = arith.constant dense<0xFF800000> : vector<9xf32>
    %148 = vector.multi_reduction <maximumf>, %147, %cst_49 [1] : vector<9x9xf32> to vector<9xf32>
    %149 = vector.shape_cast %148 : vector<9xf32> to vector<9x1xf32>
    %150 = vector.broadcast %149 : vector<9x1xf32> to vector<9x9xf32>
    %151 = arith.subf %147, %150 : vector<9x9xf32>
    %152 = math.exp %151 : vector<9x9xf32>
    %cst_50 = arith.constant dense<0.000000e+00> : vector<9xf32>
    %153 = vector.multi_reduction <add>, %152, %cst_50 [1] : vector<9x9xf32> to vector<9xf32>
    %154 = vector.shape_cast %153 : vector<9xf32> to vector<9x1xf32>
    %155 = tpu.reciprocal %154 {approx = true} : vector<9x1xf32> -> vector<9x1xf32>
    %156 = vector.broadcast %155 : vector<9x1xf32> to vector<9x9xf32>
    %157 = arith.mulf %152, %156 : vector<9x9xf32>
    %158 = arith.truncf %157 : vector<9x9xf32> to vector<9x9xbf16>
    %159 = arith.truncf %142 : vector<9x8xf32> to vector<9x8xbf16>
    %cst_51 = arith.constant dense<0.000000e+00> : vector<9x8xf32>
    %160 = tpu.matmul %158, %159, %cst_51 {dimension_numbers = #tpu.dot_dimension_numbers<[1], [0], [0], [1], [0, 0, 1, 1], [], []>} : vector<9x9xbf16>, vector<9x8xbf16>, vector<9x8xf32> -> vector<9x8xf32>
    %c16_52 = arith.constant 16 : index
    %c16_53 = arith.constant 16 : index
    %161 = vector.load %arg7[%c16_52, %c16_53] : memref<32x32xf32, #tpu.memory_space<vmem>>, vector<9x8xf32>
    tpu.vector_store %arg7[%c16_52, %c16_53], %160 {strides = array<i32>} : memref<32x32xf32, #tpu.memory_space<vmem>>, vector<9x8xf32>,
    %162 = vector.extract_strided_slice %5 {offsets = [16, 24], sizes = [9, 8], strides = [1, 1]} : vector<32x96xf32> to vector<9x8xf32>
    %163 = vector.extract_strided_slice %5 {offsets = [16, 56], sizes = [9, 8], strides = [1, 1]} : vector<32x96xf32> to vector<9x8xf32>
    %164 = vector.extract_strided_slice %5 {offsets = [16, 88], sizes = [9, 8], strides = [1, 1]} : vector<32x96xf32> to vector<9x8xf32>
    %165 = arith.truncf %162 : vector<9x8xf32> to vector<9x8xbf16>
    %166 = arith.truncf %163 : vector<9x8xf32> to vector<9x8xbf16>
    %cst_54 = arith.constant dense<0.000000e+00> : vector<9x9xf32>
    %167 = tpu.matmul %165, %166, %cst_54 {dimension_numbers = #tpu.dot_dimension_numbers<[1], [1], [0], [0], [0, 0, 1, 0], [], []>} : vector<9x8xbf16>, vector<9x8xbf16>, vector<9x9xf32> -> vector<9x9xf32>
    %cst_55 = arith.constant 0.353553385 : f32
    %168 = vector.broadcast %cst_55 : f32 to vector<9x9xf32>
    %169 = arith.mulf %168, %167 : vector<9x9xf32>
    %cst_56 = arith.constant dense<0xFF800000> : vector<9xf32>
    %170 = vector.multi_reduction <maximumf>, %169, %cst_56 [1] : vector<9x9xf32> to vector<9xf32>
    %171 = vector.shape_cast %170 : vector<9xf32> to vector<9x1xf32>
    %172 = vector.broadcast %171 : vector<9x1xf32> to vector<9x9xf32>
    %173 = arith.subf %169, %172 : vector<9x9xf32>
    %174 = math.exp %173 : vector<9x9xf32>
    %cst_57 = arith.constant dense<0.000000e+00> : vector<9xf32>
    %175 = vector.multi_reduction <add>, %174, %cst_57 [1] : vector<9x9xf32> to vector<9xf32>
    %176 = vector.shape_cast %175 : vector<9xf32> to vector<9x1xf32>
    %177 = tpu.reciprocal %176 {approx = true} : vector<9x1xf32> -> vector<9x1xf32>
    %178 = vector.broadcast %177 : vector<9x1xf32> to vector<9x9xf32>
    %179 = arith.mulf %174, %178 : vector<9x9xf32>
    %180 = arith.truncf %179 : vector<9x9xf32> to vector<9x9xbf16>
    %181 = arith.truncf %164 : vector<9x8xf32> to vector<9x8xbf16>
    %cst_58 = arith.constant dense<0.000000e+00> : vector<9x8xf32>
    %182 = tpu.matmul %180, %181, %cst_58 {dimension_numbers = #tpu.dot_dimension_numbers<[1], [0], [0], [1], [0, 0, 1, 1], [], []>} : vector<9x9xbf16>, vector<9x8xbf16>, vector<9x8xf32> -> vector<9x8xf32>
    %c16_59 = arith.constant 16 : index
    %c24_60 = arith.constant 24 : index
    %183 = vector.load %arg7[%c16_59, %c24_60] : memref<32x32xf32, #tpu.memory_space<vmem>>, vector<9x8xf32>
    tpu.vector_store %arg7[%c16_59, %c24_60], %182 {strides = array<i32>} : memref<32x32xf32, #tpu.memory_space<vmem>>, vector<9x8xf32>,
    %c0_61 = arith.constant 0 : index
    %c0_62 = arith.constant 0 : index
    %184 = vector.load %arg7[%c0_61, %c0_62] : memref<32x32xf32, #tpu.memory_space<vmem>>, vector<32x32xf32>
    %185 = arith.truncf %184 : vector<32x32xf32> to vector<32x32xbf16>
    %c0_63 = arith.constant 0 : index
    %c0_64 = arith.constant 0 : index
    %186 = vector.load %arg4[%c0_63, %c0_64] : memref<32x32xbf16, #tpu.memory_space<vmem>>, vector<32x32xbf16>
    %cst_65 = arith.constant dense<0.000000e+00> : vector<32x32xf32>
    %187 = tpu.matmul %185, %186, %cst_65 {dimension_numbers = #tpu.dot_dimension_numbers<[1], [0], [0], [1], [0, 0, 1, 1], [], []>} : vector<32x32xbf16>, vector<32x32xbf16>, vector<32x32xf32> -> vector<32x32xf32>
    %c0_66 = arith.constant 0 : index
    %c0_67 = arith.constant 0 : index
    %188 = vector.load %arg5[%c0_66, %c0_67] : memref<1x32xf32, #tpu.memory_space<vmem>>, vector<1x32xf32>
    %189 = vector.broadcast %188 : vector<1x32xf32> to vector<32x32xf32>
    %190 = arith.addf %187, %189 : vector<32x32xf32>
    %c0_68 = arith.constant 0 : index
    %c0_69 = arith.constant 0 : index
    %191 = vector.load %arg6[%c0_68, %c0_69] : memref<32x32xf32, #tpu.memory_space<vmem>>, vector<32x32xf32>
    tpu.vector_store %arg6[%c0_68, %c0_69], %190 {strides = array<i32>} : memref<32x32xf32, #tpu.memory_space<vmem>>, vector<32x32xf32>,
    return
  }
  func.func @transform_0(%arg0: i32) -> (i32, i32) {
    %c0_i32 = arith.constant 0 : i32
    %c0_i32_0 = arith.constant 0 : i32
    return %arg0, %c0_i32 : i32, i32
  }
  func.func @transform_1(%arg0: i32) -> (i32, i32) {
    %c0_i32 = arith.constant 0 : i32
    %c0_i32_0 = arith.constant 0 : i32
    %c0_i32_1 = arith.constant 0 : i32
    return %c0_i32, %c0_i32_0 : i32, i32
  }
  func.func @transform_2(%arg0: i32) -> (i32, i32) {
    %c0_i32 = arith.constant 0 : i32
    %c0_i32_0 = arith.constant 0 : i32
    %c0_i32_1 = arith.constant 0 : i32
    return %c0_i32, %c0_i32_0 : i32, i32
  }
  func.func @transform_3(%arg0: i32) -> (i32, i32) {
    %c0_i32 = arith.constant 0 : i32
    %c0_i32_0 = arith.constant 0 : i32
    %c0_i32_1 = arith.constant 0 : i32
    return %c0_i32, %c0_i32_0 : i32, i32
  }
  func.func @transform_4(%arg0: i32) -> (i32, i32) {
    %c0_i32 = arith.constant 0 : i32
    %c0_i32_0 = arith.constant 0 : i32
    %c0_i32_1 = arith.constant 0 : i32
    return %c0_i32, %c0_i32_0 : i32, i32
  }
  func.func @transform_5(%arg0: i32) -> (i32, i32) {
    %c0_i32 = arith.constant 0 : i32
    %c0_i32_0 = arith.constant 0 : i32
    return %arg0, %c0_i32 : i32, i32
  }
}

</mosaic_0001>

<llo_original>
// kernel: tpu_custom_call.1
$region0: #{tpu_custom_call.1}
  #allocation0 [shape = 'u32[]', space=smem, size = 0x4, offset = 0x4, fixed_abs, tag = 'smem constant byte address 0x4 - core index']
  #allocation1 [shape = 'u32[144,128]{1,0:T(1,128)}', space=vmem, size = 0x12000, scoped, tag = 'internal scratch']
  #allocation2 [shape = 'f32[32,32]{1,0:T(8,128)}', space=vmem, size = 0x4000, scoped, tag = 'scratch operand']
  %s0 = inlined_call_operand.vmem [shape: bf16[64,32], index: 0, kind: input, shape index: {}]
  %s1 = inlined_call_operand.vmem [shape: bf16[32,96], index: 1, kind: input, shape index: {}]
  %s2 = inlined_call_operand.vmem [shape: f32[1,96], index: 2, kind: input, shape index: {}]
  %s3 = inlined_call_operand.vmem [shape: bf16[32,32], index: 3, kind: input, shape index: {}]
  %s4 = inlined_call_operand.vmem [shape: f32[1,32], index: 4, kind: input, shape index: {}]
  %s5 = inlined_call_operand.vmem [shape: f32[64,32], index: 5, kind: output, shape index: {}]
  %s6 = sld [smem:[#allocation0]]
  $region53: #{tpu_custom_call.1} parent=0
    _
  %s8 = ssub.s32 1, %s6
  %s9 = scalar_select 0, %s8, %s6
  loop: start=0, step=1, limit=4
  $region2: #{tpu_custom_call.1} parent=0 // loop_pre_header
    _
  $region3: #{tpu_custom_call.1} parent=0 // loop_header
    %s11 = sphi 0, %s15
    %p12 = scmp.ge.s32.totalorder %s11, 4
    %s21 = sphi 0, %s23
    %s24 = sphi 0, %s21
    %s25 = sphi 0, %s24
    %s41 = sphi 0, %s25
    %s45 = sphi 0, %s45
    %s47 = sphi 0, %s45
    %s48 = sphi 0, %s47
    %s62 = sphi 0, %s48
    %s66 = sphi 0, %s66
    %s68 = sphi 0, %s66
    %s69 = sphi 0, %s68
    %s83 = sphi 0, %s69
    %s87 = sphi 0, %s87
    %s89 = sphi 0, %s87
    %s90 = sphi 0, %s89
    %s104 = sphi 0, %s90
    %s108 = sphi 0, %s108
    %s110 = sphi 0, %s108
    %s111 = sphi 0, %s110
    %s125 = sphi 0, %s111
    %s131 = sphi 0, %s133
    %s134 = sphi 0, %s131
    %s135 = sphi 0, %s134
    %s151 = sphi 0, %s135
  $region4: #{tpu_custom_call.1} parent=0 // loop_header_branch
    %14 = sbr.rel (%p12) target = $region8
  $region5: #{tpu_custom_call.1} parent=0 // loop_body
    %s16 = ssub.s32 %s11, 1
    %s17 = ssub.s32 %s11, 2
    %s18 = sadd.s32 %s11, 1
    %s19 = ssub.s32 %s11, %s18
    %p20 = scmp.eq.s32.totalorder %s19, 0
    %s22 = sadd.s32 %s21, 1
    %s23 = scalar_select %p20, %s21, %s22
    %p26 = pneg %p20
    %p27 = scmp.eq.s32.totalorder %s11, 1
    %p28 = por %p26, %p27
    %p29 = scmp.ne.s32.totalorder %s21, %s24
    %p30 = scmp.eq.s32.totalorder %s11, 0
    %p31 = por %p29, %p30
    %p32 = scmp.ne.s32.totalorder %s21, %s24
    %p33 = scmp.eq.s32.totalorder %s16, 1
    %p34 = por %p32, %p33
    %p35 = scmp.ne.s32.totalorder %s24, %s25
    %p36 = scmp.eq.s32.totalorder %s16, 0
    %p37 = por %p35, %p36
    %p38 = scmp.ne.s32.totalorder %s24, %s25
    %p39 = scmp.eq.s32.totalorder %s17, 1
    %p40 = por %p38, %p39
    %p42 = scmp.ne.s32.totalorder %s25, %s41
    %p43 = scmp.eq.s32.totalorder %s17, 0
    %p44 = por %p42, %p43
    %s46 = sadd.s32 %s45, 1
    %p49 = scmp.eq.s32.totalorder %s11, 1
    %p50 = scmp.ne.s32.totalorder %s45, %s47
    %p51 = scmp.eq.s32.totalorder %s11, 0
    %p52 = por %p50, %p51
    %p53 = scmp.ne.s32.totalorder %s45, %s47
    %p54 = scmp.eq.s32.totalorder %s16, 1
    %p55 = por %p53, %p54
    %p56 = scmp.ne.s32.totalorder %s47, %s48
    %p57 = scmp.eq.s32.totalorder %s16, 0
    %p58 = por %p56, %p57
    %p59 = scmp.ne.s32.totalorder %s47, %s48
    %p60 = scmp.eq.s32.totalorder %s17, 1
    %p61 = por %p59, %p60
    %p63 = scmp.ne.s32.totalorder %s48, %s62
    %p64 = scmp.eq.s32.totalorder %s17, 0
    %p65 = por %p63, %p64
    %s67 = sadd.s32 %s66, 1
    %p70 = scmp.eq.s32.totalorder %s11, 1
    %p71 = scmp.ne.s32.totalorder %s66, %s68
    %p72 = scmp.eq.s32.totalorder %s11, 0
    %p73 = por %p71, %p72
    %p74 = scmp.ne.s32.totalorder %s66, %s68
    %p75 = scmp.eq.s32.totalorder %s16, 1
    %p76 = por %p74, %p75
    %p77 = scmp.ne.s32.totalorder %s68, %s69
    %p78 = scmp.eq.s32.totalorder %s16, 0
    %p79 = por %p77, %p78
    %p80 = scmp.ne.s32.totalorder %s68, %s69
    %p81 = scmp.eq.s32.totalorder %s17, 1
    %p82 = por %p80, %p81
    %p84 = scmp.ne.s32.totalorder %s69, %s83
    %p85 = scmp.eq.s32.totalorder %s17, 0
    %p86 = por %p84, %p85
    %s88 = sadd.s32 %s87, 1
    %p91 = scmp.eq.s32.totalorder %s11, 1
    %p92 = scmp.ne.s32.totalorder %s87, %s89
    %p93 = scmp.eq.s32.totalorder %s11, 0
    %p94 = por %p92, %p93
    %p95 = scmp.ne.s32.totalorder %s87, %s89
    %p96 = scmp.eq.s32.totalorder %s16, 1
    %p97 = por %p95, %p96
    %p98 = scmp.ne.s32.totalorder %s89, %s90
    %p99 = scmp.eq.s32.totalorder %s16, 0
    %p100 = por %p98, %p99
    %p101 = scmp.ne.s32.totalorder %s89, %s90
    %p102 = scmp.eq.s32.totalorder %s17, 1
    %p103 = por %p101, %p102
    %p105 = scmp.ne.s32.totalorder %s90, %s104
    %p106 = scmp.eq.s32.totalorder %s17, 0
    %p107 = por %p105, %p106
    %s109 = sadd.s32 %s108, 1
    %p112 = scmp.eq.s32.totalorder %s11, 1
    %p113 = scmp.ne.s32.totalorder %s108, %s110
    %p114 = scmp.eq.s32.totalorder %s11, 0
    %p115 = por %p113, %p114
    %p116 = scmp.ne.s32.totalorder %s108, %s110
    %p117 = scmp.eq.s32.totalorder %s16, 1
    %p118 = por %p116, %p117
    %p119 = scmp.ne.s32.totalorder %s110, %s111
    %p120 = scmp.eq.s32.totalorder %s16, 0
    %p121 = por %p119, %p120
    %p122 = scmp.ne.s32.totalorder %s110, %s111
    %p123 = scmp.eq.s32.totalorder %s17, 1
    %p124 = por %p122, %p123
    %p126 = scmp.ne.s32.totalorder %s111, %s125
    %p127 = scmp.eq.s32.totalorder %s17, 0
    %p128 = por %p126, %p127
    %s129 = ssub.s32 %s11, %s18
    %p130 = scmp.eq.s32.totalorder %s129, 0
    %s132 = sadd.s32 %s131, 1
    %s133 = scalar_select %p130, %s131, %s132
    %p136 = pneg %p130
    %p137 = scmp.eq.s32.totalorder %s11, 1
    %p138 = por %p136, %p137
    %p139 = scmp.ne.s32.totalorder %s131, %s134
    %p140 = scmp.eq.s32.totalorder %s11, 0
    %p141 = por %p139, %p140
    %p142 = scmp.ne.s32.totalorder %s131, %s134
    %p143 = scmp.eq.s32.totalorder %s16, 1
    %p144 = por %p142, %p143
    %p145 = scmp.ne.s32.totalorder %s134, %s135
    %p146 = scmp.eq.s32.totalorder %s16, 0
    %p147 = por %p145, %p146
    %p148 = scmp.ne.s32.totalorder %s134, %s135
    %p149 = scmp.eq.s32.totalorder %s17, 1
    %p150 = por %p148, %p149
    %p152 = scmp.ne.s32.totalorder %s135, %s151
    %p153 = scmp.eq.s32.totalorder %s17, 0
    %p154 = por %p152, %p153
    %p155 = scmp.le.s32.totalorder 1, %s11
    %p156 = scmp.lt.s32.totalorder %s11, 3
    %p157 = pnand %p155, %p156
    %p158 = pneg %p157
    // Predicated region
    $region9: #{tpu_custom_call.1} parent=5 // pred_check
      _
    $region10: #{tpu_custom_call.1} parent=5 // pred_check_branch
      %160 = sbr.rel (%p157) target = $region12
    $region11: #{tpu_custom_call.1} parent=5 // pred_region
      %s161 = ssub.s32 %s11, 1
      // Predicated region
      $region13: #{tpu_custom_call.1} parent=11 // pred_check
        %p162 = pneg %p58
      $region14: #{tpu_custom_call.1} parent=11 // pred_check_branch
        %164 = sbr.rel (%p162) target = $region16
      $region15: #{tpu_custom_call.1} parent=11 // pred_region
        _
      $region16: #{tpu_custom_call.1} parent=11 // pred_fallthru
        _
      // Predicated region
      $region17: #{tpu_custom_call.1} parent=11 // pred_check
        %p165 = pneg %p79
      $region18: #{tpu_custom_call.1} parent=11 // pred_check_branch
        %167 = sbr.rel (%p165) target = $region20
      $region19: #{tpu_custom_call.1} parent=11 // pred_region
        _
      $region20: #{tpu_custom_call.1} parent=11 // pred_fallthru
        _
      // Predicated region
      $region21: #{tpu_custom_call.1} parent=11 // pred_check
        %p168 = pneg %p100
      $region22: #{tpu_custom_call.1} parent=11 // pred_check_branch
        %170 = sbr.rel (%p168) target = $region24
      $region23: #{tpu_custom_call.1} parent=11 // pred_region
        _
      $region24: #{tpu_custom_call.1} parent=11 // pred_fallthru
        _
      // Predicated region
      $region25: #{tpu_custom_call.1} parent=11 // pred_check
        %p171 = pneg %p121
      $region26: #{tpu_custom_call.1} parent=11 // pred_check_branch
        %173 = sbr.rel (%p171) target = $region28
      $region27: #{tpu_custom_call.1} parent=11 // pred_region
        _
      $region28: #{tpu_custom_call.1} parent=11 // pred_fallthru
        _
    $region12: #{tpu_custom_call.1} parent=5 // pred_fallthru
      _
    %p174 = scmp.lt.s32.totalorder %s11, 2
    // Predicated region
    $region29: #{tpu_custom_call.1} parent=5 // pred_check
      %p175 = pneg %p174
    $region30: #{tpu_custom_call.1} parent=5 // pred_check_branch
      %177 = sbr.rel (%p175) target = $region32
    $region31: #{tpu_custom_call.1} parent=5 // pred_region
      // Predicated region
      $region33: #{tpu_custom_call.1} parent=31 // pred_check
        %p178 = pneg %p31
      $region34: #{tpu_custom_call.1} parent=31 // pred_check_branch
        %180 = sbr.rel (%p178) target = $region36
      $region35: #{tpu_custom_call.1} parent=31 // pred_region
        %s181 = smul.u32 4, %s11
        %p182 = scmp.lt.s32.totalorder %s181, 7
        %s183 = scalar_select %p182, %s181, 7
        %s184 = smul.addr %s183, 4
        %s185 = scalar_lea.vmem %s0, %s184
        %s186 = smul.u32 4, %s11
      $region36: #{tpu_custom_call.1} parent=31 // pred_fallthru
        _
    $region32: #{tpu_custom_call.1} parent=5 // pred_fallthru
      _
    %p187 = scmp.le.s32.totalorder 1, %s11
    %p188 = scmp.lt.s32.totalorder %s11, 3
    %p189 = pnand %p187, %p188
    %p190 = pneg %p189
    // Predicated region
    $region37: #{tpu_custom_call.1} parent=5 // pred_check
      _
    $region38: #{tpu_custom_call.1} parent=5 // pred_check_branch
      %192 = sbr.rel (%p189) target = $region40
    $region39: #{tpu_custom_call.1} parent=5 // pred_region
      %s193 = ssub.s32 %s11, 1
      %s194 = smul.u32 4, %s16
      %p195 = scmp.lt.s32.totalorder %s194, 7
      %s196 = scalar_select %p195, %s194, 7
      %s197 = smul.addr %s196, 4
      %s198 = scalar_lea.vmem %s0, %s197
      %p199 = pneg %p37
      %p200 = pneg %p34
      %p201 = pneg %p58
      %p202 = pneg %p55
      %p203 = pneg %p79
      %p204 = pneg %p76
      %p205 = pneg %p100
      %p206 = pneg %p97
      %p207 = pneg %p121
      %p208 = pneg %p118
      %p209 = pneg %p147
      %p210 = pneg %p144
      %s211 = smul.u32 4, %s16
      %p212 = scmp.lt.s32.totalorder %s211, 7
      %s213 = scalar_select %p212, %s211, 7
      %s214 = smul.addr %s213, 8
      %s215 = scalar_lea.vmem %s5, %s214
      %s216 = smul.u32 4, %s16
      %p217 = scmp.lt.s32.totalorder %s216, 7
      %s218 = scalar_select %p217, %s216, 7
      %s219 = smul.addr %s218, 4
      %s220 = scalar_lea.vmem %s0, %s219
      %s221 = smul.u32 4, %s16
      %s222 = smul.u32 4, %s16
      %p223 = scmp.lt.s32.totalorder %s222, 7
      %s224 = scalar_select %p223, %s222, 7
      %s225 = smul.addr %s224, 8
      %s226 = scalar_lea.vmem %s5, %s225
      %s227 = smul.u32 4, %s16
      %v229 = vld [vmem:[%s220] sm:$0xf]
      %v230 = vld [vmem:[%s220 + $0x4] sm:$0xf]
      %v231 = vld [vmem:[%s220 + $0x8] sm:$0xf]
      %v232 = vld [vmem:[%s220 + $0xc] sm:$0xf]
      %v233 = vld [vmem:[%s1] sm:$0xf]
      %v234 = vld [vmem:[%s1 + $0x4] sm:$0xf]
      %v235 = vld [vmem:[%s1 + $0x8] sm:$0xf]
      %v236 = vld [vmem:[%s1 + $0xc] sm:$0xf]
      %v237 = vld [vmem:[%s2] sm:$0x1]
      %v239 = vlaneseq
      %v240 = vshrl.u32 %v239, 7
      %v241 = vsub.s32 0, %v240
      %v242 = vrot.slane %v237, %v241
      %v248 = vunpack.c.l.b16 %v229
      %v249 = vunpack.c.l.b16 %v230
      %v250 = vunpack.c.l.b16 %v231
      %v251 = vunpack.c.l.b16 %v232
      %v252 = vpack.c.b16 %v249, %v248
      %v253 = vpack.c.b16 %v251, %v250
      %v258 = vunpack.c.l.b16 %v233
      %v259 = vunpack.c.l.b16 %v234
      %v260 = vunpack.c.l.b16 %v235
      %v261 = vunpack.c.l.b16 %v236
      %v262 = vpack.c.b16 %v259, %v258
      %v263 = vpack.c.b16 %v261, %v260
      %vm266 = vcmask 261120
      %v268 = vsel %vm266, %v252, 0
      %v271 = vsel %vm266, %v253, 0
      %273 = vmatprep.subr.bf16.mxu0 0
      %274 = vmatpush1.bf16.msra.mxu0 0
      %275 = vmatprep.subr.bf16.mxu0 0
      %276 = vmatpush1.bf16.msra.mxu0 0
      %277 = vmatprep.subr.bf16.mxu0 0
      %278 = vmatpush1.bf16.msra.mxu0 0
      %279 = vmatprep.subr.bf16.mxu0 0
      %280 = vmatpush1.bf16.msra.mxu0 0
      %281 = vmatprep.subr.bf16.mxu0 0
      %282 = vmatpush1.bf16.msra.mxu0 0
      %283 = vmatprep.subr.bf16.mxu0 0
      %284 = vmatpush1.bf16.msra.mxu0 0
      %285 = vmatprep.subr.bf16.mxu0 0
      %286 = vmatpush1.bf16.msra.mxu0 %v263
      %287 = vmatprep.subr.bf16.mxu0 0
      %288 = vmatpush1.bf16.msra.mxu0 %v262
      %289 = vmatprep.subr.bf16.mxu0 0
      %290 = vmatpush2.bf16.msra.mxu0 0
      %291 = vmatprep.subr.bf16.mxu0 0
      %292 = vmatpush2.bf16.msra.mxu0 0
      %293 = vmatprep.subr.bf16.mxu0 0
      %294 = vmatpush2.bf16.msra.mxu0 0
      %295 = vmatprep.subr.bf16.mxu0 0
      %296 = vmatpush2.bf16.msra.mxu0 0
      %297 = vmatprep.subr.bf16.mxu0 0
      %298 = vmatpush2.bf16.msra.mxu0 0
      %299 = vmatprep.subr.bf16.mxu0 0
      %300 = vmatpush2.bf16.msra.mxu0 0
      %301 = vmatprep.subr.bf16.mxu0 0
      %302 = vmatpush2.bf16.msra.mxu0 0
      %303 = vmatprep.subr.bf16.mxu0 0
      %304 = vmatpush2.bf16.msra.mxu0 0
      %305 = vmatprep.mubr.bf16.mxu0 0
      %306 = vmatmul.mubr.bf16.gmra.mxu0 %v268
      %v307 = vpop.f32.mrf.mxu0
      %v308 = vadd.f32 %v242, %v307
      %v309 = vpop.f32.mrf.mxu0
      %v310 = vpop.f32.mrf.mxu0
      %v311 = vadd.f32 %v242, %v310
      %v312 = vpop.f32.mrf.mxu0
      %313 = vmatprep.mubr.bf16.mxu0 0
      %314 = vmatmul.mubr.bf16.gmra.mxu0 %v271
      %v315 = vpop.f32.mrf.mxu0
      %v316 = vadd.f32 %v242, %v315
      %v317 = vpop.f32.mrf.mxu0
      %v318 = vpop.f32.mrf.mxu0
      %v319 = vadd.f32 %v242, %v318
      %v320 = vpop.f32.mrf.mxu0
      %321 = vdwg.mxu0
      %322 = vst.msk [vmem:[#allocation2] sm:$0xff] %vm266, 0.0
      %323 = vst.msk [vmem:[#allocation2 + $0x8] sm:$0xff] %vm266, 0.0
      %324 = vst.msk [vmem:[#allocation2 + $0x10] sm:$0xff] %vm266, 0.0
      %325 = vst.msk [vmem:[#allocation2 + $0x18] sm:$0xff] %vm266, 0.0
      %v326 = vpack.c.bf16 %v311, %v308
      %328 = vrot.lane.b32.xlu0 %v326, 96
      %v329 = vpop.permute.xlu0 %328
      %vm330 = vcmask 64512
      %v332 = vsel %vm330, %v326, 0
      %v335 = vsel %vm330, %v329, 0
      %337 = vmatprep.subr.bf16.mxu0 0
      %338 = vmatpush1.bf16.xpose.msra.mxu0 0
      %339 = vmatprep.subr.bf16.mxu0 0
      %340 = vmatpush1.bf16.xpose.msra.mxu0 0
      %341 = vmatprep.subr.bf16.mxu0 0
      %342 = vmatpush1.bf16.xpose.msra.mxu0 0
      %343 = vmatprep.subr.bf16.mxu0 0
      %344 = vmatpush1.bf16.xpose.msra.mxu0 0
      %345 = vmatprep.subr.bf16.mxu0 0
      %346 = vmatpush1.bf16.xpose.msra.mxu0 0
      %347 = vmatprep.subr.bf16.mxu0 0
      %348 = vmatpush1.bf16.xpose.msra.mxu0 0
      %349 = vmatprep.subr.bf16.mxu0 0
      %350 = vmatpush1.bf16.xpose.msra.mxu0 0
      %351 = vmatprep.subr.bf16.mxu0 0
      %352 = vmatpush1.bf16.xpose.msra.mxu0 %v335
      %353 = vmatprep.subr.bf16.mxu0 0
      %354 = vmatpush2.bf16.xpose.msra.mxu0 0
      %355 = vmatprep.subr.bf16.mxu0 0
      %356 = vmatpush2.bf16.xpose.msra.mxu0 0
      %357 = vmatprep.subr.bf16.mxu0 0
      %358 = vmatpush2.bf16.xpose.msra.mxu0 0
      %359 = vmatprep.subr.bf16.mxu0 0
      %360 = vmatpush2.bf16.xpose.msra.mxu0 0
      %361 = vmatprep.subr.bf16.mxu0 0
      %362 = vmatpush2.bf16.xpose.msra.mxu0 0
      %363 = vmatprep.subr.bf16.mxu0 0
      %364 = vmatpush2.bf16.xpose.msra.mxu0 0
      %365 = vmatprep.subr.bf16.mxu0 0
      %366 = vmatpush2.bf16.xpose.msra.mxu0 0
      %367 = vmatprep.subr.bf16.mxu0 0
      %368 = vmatpush2.bf16.xpose.msra.mxu0 0
      %369 = vmatprep.mubr.bf16.mxu0 0
      %370 = vmatmul.mubr.bf16.gmra.mxu0 %v332
      %v371 = vpop.f32.mrf.mxu0
      %v372 = vadd.f32 0.0, %v371
      %v373 = vpop.f32.mrf.mxu0
      %v374 = vpop.f32.mrf.mxu0
      %v375 = vadd.f32 0.0, %v374
      %v376 = vpop.f32.mrf.mxu0
      %377 = vdwg.mxu0
      %v378 = vmul.f32 %v372, 0.35355338
      %v379 = vmul.f32 %v375, 0.35355338
      %vm380 = vcmask 72704
      %v381 = vsel %vm380, %v378, -inf
      %382 = vmax.xlane.f32.xlu0 %v381
      %v383 = vpop.xlane.xlu0 %382
      %vm384 = vcmask 65536
      %v385 = vsel %vm384, %v379, -inf
      %386 = vmax.xlane.f32.xlu0 %v385
      %v387 = vpop.xlane.xlu0 %386
      %v388 = vsub.f32 %v378, %v383
      %v389 = vsub.f32 %v379, %v387
      %v390 = vmul.f32 %v388, 1.442695
      %v391 = vpow.pop %v390
      %v392 = vmul.f32 %v389, 1.442695
      %v393 = vpow.pop %v392
      %v394 = vsel %vm380, %v391, 0.0
      %395 = vadd.xlane.f32.xlu0 %v394
      %v396 = vpop.xlane.xlu0 %395
      %v397 = vsel %vm384, %v393, 0.0
      %398 = vadd.xlane.f32.xlu0 %v397
      %v399 = vpop.xlane.xlu0 %398
      %v400 = vrcp.pop %v396
      %v401 = vrcp.pop %v399
      %v402 = vmul.f32 %v391, %v400
      %v403 = vmul.f32 %v393, %v401
      %v404 = vpack.c.bf16 %v403, %v402
      %405 = vrot.lane.b32.xlu0 %v326, 64
      %v406 = vpop.permute.xlu0 %405
      %v408 = vsel %vm380, %v404, 0
      %vm410 = vcmask 1043456
      %vm411 = vcmask 1044480
      %v412 = vsel %vm410, 4294967295, 65535
      %v413 = vsel %vm411, %v412, 0
      %v415 = vand.u32 %v406, %v413
      %417 = vmatprep.subr.bf16.mxu0 0
      %418 = vmatpush1.bf16.msra.mxu0 0
      %419 = vmatprep.subr.bf16.mxu0 0
      %420 = vmatpush1.bf16.msra.mxu0 0
      %421 = vmatprep.subr.bf16.mxu0 0
      %422 = vmatpush1.bf16.msra.mxu0 0
      %423 = vmatprep.subr.bf16.mxu0 0
      %424 = vmatpush1.bf16.msra.mxu0 0
      %425 = vmatprep.subr.bf16.mxu0 0
      %426 = vmatpush1.bf16.msra.mxu0 0
      %427 = vmatprep.subr.bf16.mxu0 0
      %428 = vmatpush1.bf16.msra.mxu0 0
      %429 = vmatprep.subr.bf16.mxu0 0
      %430 = vmatpush1.bf16.msra.mxu0 0
      %431 = vmatprep.subr.bf16.mxu0 0
      %432 = vmatpush1.bf16.msra.mxu0 %v415
      %433 = vmatprep.subr.bf16.mxu0 0
      %434 = vmatpush2.bf16.msra.mxu0 0
      %435 = vmatprep.subr.bf16.mxu0 0
      %436 = vmatpush2.bf16.msra.mxu0 0
      %437 = vmatprep.subr.bf16.mxu0 0
      %438 = vmatpush2.bf16.msra.mxu0 0
      %439 = vmatprep.subr.bf16.mxu0 0
      %440 = vmatpush2.bf16.msra.mxu0 0
      %441 = vmatprep.subr.bf16.mxu0 0
      %442 = vmatpush2.bf16.msra.mxu0 0
      %443 = vmatprep.subr.bf16.mxu0 0
      %444 = vmatpush2.bf16.msra.mxu0 0
      %445 = vmatprep.subr.bf16.mxu0 0
      %446 = vmatpush2.bf16.msra.mxu0 0
      %447 = vmatprep.subr.bf16.mxu0 0
      %448 = vmatpush2.bf16.msra.mxu0 0
      %449 = vmatprep.mubr.bf16.mxu0 0
      %450 = vmatmul.mubr.bf16.gmra.mxu0 %v408
      %v451 = vpop.f32.mrf.mxu0
      %v452 = vadd.f32 0.0, %v451
      %v453 = vpop.f32.mrf.mxu0
      %v454 = vpop.f32.mrf.mxu0
      %v455 = vadd.f32 0.0, %v454
      %v456 = vpop.f32.mrf.mxu0
      %457 = vdwg.mxu0
      %458 = vst.msk [vmem:[#allocation2] sm:$0xff] %vm330, %v452
      %vm459 = vcmask 57344
      %460 = vst.msk [vmem:[#allocation2 + $0x8] sm:$0x1] %vm459, %v455
      %461 = vrot.lane.b32.xlu0 %v326, 120
      %v462 = vpop.permute.xlu0 %461
      %463 = vrot.lane.b32.xlu0 %v326, 88
      %v464 = vpop.permute.xlu0 %463
      %v466 = vsel %vm330, %v462, 0
      %v469 = vsel %vm330, %v464, 0
      %471 = vmatprep.subr.bf16.mxu0 0
      %472 = vmatpush1.bf16.xpose.msra.mxu0 0
      %473 = vmatprep.subr.bf16.mxu0 0
      %474 = vmatpush1.bf16.xpose.msra.mxu0 0
      %475 = vmatprep.subr.bf16.mxu0 0
      %476 = vmatpush1.bf16.xpose.msra.mxu0 0
      %477 = vmatprep.subr.bf16.mxu0 0
      %478 = vmatpush1.bf16.xpose.msra.mxu0 0
      %479 = vmatprep.subr.bf16.mxu0 0
      %480 = vmatpush1.bf16.xpose.msra.mxu0 0
      %481 = vmatprep.subr.bf16.mxu0 0
      %482 = vmatpush1.bf16.xpose.msra.mxu0 0
      %483 = vmatprep.subr.bf16.mxu0 0
      %484 = vmatpush1.bf16.xpose.msra.mxu0 0
      %485 = vmatprep.subr.bf16.mxu0 0
      %486 = vmatpush1.bf16.xpose.msra.mxu0 %v469
      %487 = vmatprep.subr.bf16.mxu0 0
      %488 = vmatpush2.bf16.xpose.msra.mxu0 0
      %489 = vmatprep.subr.bf16.mxu0 0
      %490 = vmatpush2.bf16.xpose.msra.mxu0 0
      %491 = vmatprep.subr.bf16.mxu0 0
      %492 = vmatpush2.bf16.xpose.msra.mxu0 0
      %493 = vmatprep.subr.bf16.mxu0 0
      %494 = vmatpush2.bf16.xpose.msra.mxu0 0
      %495 = vmatprep.subr.bf16.mxu0 0
      %496 = vmatpush2.bf16.xpose.msra.mxu0 0
      %497 = vmatprep.subr.bf16.mxu0 0
      %498 = vmatpush2.bf16.xpose.msra.mxu0 0
      %499 = vmatprep.subr.bf16.mxu0 0
      %500 = vmatpush2.bf16.xpose.msra.mxu0 0
      %501 = vmatprep.subr.bf16.mxu0 0
      %502 = vmatpush2.bf16.xpose.msra.mxu0 0
      %503 = vmatprep.mubr.bf16.mxu0 0
      %504 = vmatmul.mubr.bf16.gmra.mxu0 %v466
      %v505 = vpop.f32.mrf.mxu0
      %v506 = vadd.f32 0.0, %v505
      %v507 = vpop.f32.mrf.mxu0
      %v508 = vpop.f32.mrf.mxu0
      %v509 = vadd.f32 0.0, %v508
      %v510 = vpop.f32.mrf.mxu0
      %511 = vdwg.mxu0
      %v512 = vmul.f32 %v506, 0.35355338
      %v513 = vmul.f32 %v509, 0.35355338
      %v514 = vsel %vm380, %v512, -inf
      %515 = vmax.xlane.f32.xlu0 %v514
      %v516 = vpop.xlane.xlu0 %515
      %v517 = vsel %vm384, %v513, -inf
      %518 = vmax.xlane.f32.xlu0 %v517
      %v519 = vpop.xlane.xlu0 %518
      %v520 = vsub.f32 %v512, %v516
      %v521 = vsub.f32 %v513, %v519
      %v522 = vmul.f32 %v520, 1.442695
      %v523 = vpow.pop %v522
      %v524 = vmul.f32 %v521, 1.442695
      %v525 = vpow.pop %v524
      %v526 = vsel %vm380, %v523, 0.0
      %527 = vadd.xlane.f32.xlu0 %v526
      %v528 = vpop.xlane.xlu0 %527
      %v529 = vsel %vm384, %v525, 0.0
      %530 = vadd.xlane.f32.xlu0 %v529
      %v531 = vpop.xlane.xlu0 %530
      %v532 = vrcp.pop %v528
      %v533 = vrcp.pop %v531
      %v534 = vmul.f32 %v523, %v532
      %v535 = vmul.f32 %v525, %v533
      %v536 = vpack.c.bf16 %v535, %v534
      %537 = vrot.lane.b32.xlu0 %v326, 56
      %v538 = vpop.permute.xlu0 %537
      %v540 = vsel %vm380, %v536, 0
      %v543 = vand.u32 %v538, %v413
      %545 = vmatprep.subr.bf16.mxu0 0
      %546 = vmatpush1.bf16.msra.mxu0 0
      %547 = vmatprep.subr.bf16.mxu0 0
      %548 = vmatpush1.bf16.msra.mxu0 0
      %549 = vmatprep.subr.bf16.mxu0 0
      %550 = vmatpush1.bf16.msra.mxu0 0
      %551 = vmatprep.subr.bf16.mxu0 0
      %552 = vmatpush1.bf16.msra.mxu0 0
      %553 = vmatprep.subr.bf16.mxu0 0
      %554 = vmatpush1.bf16.msra.mxu0 0
      %555 = vmatprep.subr.bf16.mxu0 0
      %556 = vmatpush1.bf16.msra.mxu0 0
      %557 = vmatprep.subr.bf16.mxu0 0
      %558 = vmatpush1.bf16.msra.mxu0 0
      %559 = vmatprep.subr.bf16.mxu0 0
      %560 = vmatpush1.bf16.msra.mxu0 %v543
      %561 = vmatprep.subr.bf16.mxu0 0
      %562 = vmatpush2.bf16.msra.mxu0 0
      %563 = vmatprep.subr.bf16.mxu0 0
      %564 = vmatpush2.bf16.msra.mxu0 0
      %565 = vmatprep.subr.bf16.mxu0 0
      %566 = vmatpush2.bf16.msra.mxu0 0
      %567 = vmatprep.subr.bf16.mxu0 0
      %568 = vmatpush2.bf16.msra.mxu0 0
      %569 = vmatprep.subr.bf16.mxu0 0
      %570 = vmatpush2.bf16.msra.mxu0 0
      %571 = vmatprep.subr.bf16.mxu0 0
      %572 = vmatpush2.bf16.msra.mxu0 0
      %573 = vmatprep.subr.bf16.mxu0 0
      %574 = vmatpush2.bf16.msra.mxu0 0
      %575 = vmatprep.subr.bf16.mxu0 0
      %576 = vmatpush2.bf16.msra.mxu0 0
      %577 = vmatprep.mubr.bf16.mxu0 0
      %578 = vmatmul.mubr.bf16.gmra.mxu0 %v540
      %v579 = vpop.f32.mrf.mxu0
      %v580 = vadd.f32 0.0, %v579
      %v581 = vpop.f32.mrf.mxu0
      %v582 = vpop.f32.mrf.mxu0
      %v583 = vadd.f32 0.0, %v582
      %v584 = vpop.f32.mrf.mxu0
      %585 = vdwg.mxu0
      %588 = vrot.lane.b32.xlu0 %v580, 8
      %v589 = vpop.permute.xlu0 %588
      %590 = vrot.lane.b32.xlu0 %v583, 8
      %v591 = vpop.permute.xlu0 %590
      %vm594 = vcmask 130112
      %595 = vst.msk [vmem:[#allocation2] sm:$0xff] %vm594, %v589
      %vm596 = vcmask 122944
      %597 = vst.msk [vmem:[#allocation2 + $0x8] sm:$0x1] %vm596, %v591
      %598 = vrot.lane.b32.xlu0 %v326, 112
      %v599 = vpop.permute.xlu0 %598
      %600 = vrot.lane.b32.xlu0 %v326, 80
      %v601 = vpop.permute.xlu0 %600
      %v603 = vsel %vm330, %v599, 0
      %v606 = vsel %vm330, %v601, 0
      %608 = vmatprep.subr.bf16.mxu0 0
      %609 = vmatpush1.bf16.xpose.msra.mxu0 0
      %610 = vmatprep.subr.bf16.mxu0 0
      %611 = vmatpush1.bf16.xpose.msra.mxu0 0
      %612 = vmatprep.subr.bf16.mxu0 0
      %613 = vmatpush1.bf16.xpose.msra.mxu0 0
      %614 = vmatprep.subr.bf16.mxu0 0
      %615 = vmatpush1.bf16.xpose.msra.mxu0 0
      %616 = vmatprep.subr.bf16.mxu0 0
      %617 = vmatpush1.bf16.xpose.msra.mxu0 0
      %618 = vmatprep.subr.bf16.mxu0 0
      %619 = vmatpush1.bf16.xpose.msra.mxu0 0
      %620 = vmatprep.subr.bf16.mxu0 0
      %621 = vmatpush1.bf16.xpose.msra.mxu0 0
      %622 = vmatprep.subr.bf16.mxu0 0
      %623 = vmatpush1.bf16.xpose.msra.mxu0 %v606
      %624 = vmatprep.subr.bf16.mxu0 0
      %625 = vmatpush2.bf16.xpose.msra.mxu0 0
      %626 = vmatprep.subr.bf16.mxu0 0
      %627 = vmatpush2.bf16.xpose.msra.mxu0 0
      %628 = vmatprep.subr.bf16.mxu0 0
      %629 = vmatpush2.bf16.xpose.msra.mxu0 0
      %630 = vmatprep.subr.bf16.mxu0 0
      %631 = vmatpush2.bf16.xpose.msra.mxu0 0
      %632 = vmatprep.subr.bf16.mxu0 0
      %633 = vmatpush2.bf16.xpose.msra.mxu0 0
      %634 = vmatprep.subr.bf16.mxu0 0
      %635 = vmatpush2.bf16.xpose.msra.mxu0 0
      %636 = vmatprep.subr.bf16.mxu0 0
      %637 = vmatpush2.bf16.xpose.msra.mxu0 0
      %638 = vmatprep.subr.bf16.mxu0 0
      %639 = vmatpush2.bf16.xpose.msra.mxu0 0
      %640 = vmatprep.mubr.bf16.mxu0 0
      %641 = vmatmul.mubr.bf16.gmra.mxu0 %v603
      %v642 = vpop.f32.mrf.mxu0
      %v643 = vadd.f32 0.0, %v642
      %v644 = vpop.f32.mrf.mxu0
      %v645 = vpop.f32.mrf.mxu0
      %v646 = vadd.f32 0.0, %v645
      %v647 = vpop.f32.mrf.mxu0
      %648 = vdwg.mxu0
      %v649 = vmul.f32 %v643, 0.35355338
      %v650 = vmul.f32 %v646, 0.35355338
      %v651 = vsel %vm380, %v649, -inf
      %652 = vmax.xlane.f32.xlu0 %v651
      %v653 = vpop.xlane.xlu0 %652
      %v654 = vsel %vm384, %v650, -inf
      %655 = vmax.xlane.f32.xlu0 %v654
      %v656 = vpop.xlane.xlu0 %655
      %v657 = vsub.f32 %v649, %v653
      %v658 = vsub.f32 %v650, %v656
      %v659 = vmul.f32 %v657, 1.442695
      %v660 = vpow.pop %v659
      %v661 = vmul.f32 %v658, 1.442695
      %v662 = vpow.pop %v661
      %v663 = vsel %vm380, %v660, 0.0
      %664 = vadd.xlane.f32.xlu0 %v663
      %v665 = vpop.xlane.xlu0 %664
      %v666 = vsel %vm384, %v662, 0.0
      %667 = vadd.xlane.f32.xlu0 %v666
      %v668 = vpop.xlane.xlu0 %667
      %v669 = vrcp.pop %v665
      %v670 = vrcp.pop %v668
      %v671 = vmul.f32 %v660, %v669
      %v672 = vmul.f32 %v662, %v670
      %v673 = vpack.c.bf16 %v672, %v671
      %674 = vrot.lane.b32.xlu0 %v326, 48
      %v675 = vpop.permute.xlu0 %674
      %v677 = vsel %vm380, %v673, 0
      %v680 = vand.u32 %v675, %v413
      %682 = vmatprep.subr.bf16.mxu0 0
      %683 = vmatpush1.bf16.msra.mxu0 0
      %684 = vmatprep.subr.bf16.mxu0 0
      %685 = vmatpush1.bf16.msra.mxu0 0
      %686 = vmatprep.subr.bf16.mxu0 0
      %687 = vmatpush1.bf16.msra.mxu0 0
      %688 = vmatprep.subr.bf16.mxu0 0
      %689 = vmatpush1.bf16.msra.mxu0 0
      %690 = vmatprep.subr.bf16.mxu0 0
      %691 = vmatpush1.bf16.msra.mxu0 0
      %692 = vmatprep.subr.bf16.mxu0 0
      %693 = vmatpush1.bf16.msra.mxu0 0
      %694 = vmatprep.subr.bf16.mxu0 0
      %695 = vmatpush1.bf16.msra.mxu0 0
      %696 = vmatprep.subr.bf16.mxu0 0
      %697 = vmatpush1.bf16.msra.mxu0 %v680
      %698 = vmatprep.subr.bf16.mxu0 0
      %699 = vmatpush2.bf16.msra.mxu0 0
      %700 = vmatprep.subr.bf16.mxu0 0
      %701 = vmatpush2.bf16.msra.mxu0 0
      %702 = vmatprep.subr.bf16.mxu0 0
      %703 = vmatpush2.bf16.msra.mxu0 0
      %704 = vmatprep.subr.bf16.mxu0 0
      %705 = vmatpush2.bf16.msra.mxu0 0
      %706 = vmatprep.subr.bf16.mxu0 0
      %707 = vmatpush2.bf16.msra.mxu0 0
      %708 = vmatprep.subr.bf16.mxu0 0
      %709 = vmatpush2.bf16.msra.mxu0 0
      %710 = vmatprep.subr.bf16.mxu0 0
      %711 = vmatpush2.bf16.msra.mxu0 0
      %712 = vmatprep.subr.bf16.mxu0 0
      %713 = vmatpush2.bf16.msra.mxu0 0
      %714 = vmatprep.mubr.bf16.mxu0 0
      %715 = vmatmul.mubr.bf16.gmra.mxu0 %v677
      %v716 = vpop.f32.mrf.mxu0
      %v717 = vadd.f32 0.0, %v716
      %v718 = vpop.f32.mrf.mxu0
      %v719 = vpop.f32.mrf.mxu0
      %v720 = vadd.f32 0.0, %v719
      %v721 = vpop.f32.mrf.mxu0
      %722 = vdwg.mxu0
      %725 = vrot.lane.b32.xlu0 %v717, 16
      %v726 = vpop.permute.xlu0 %725
      %727 = vrot.lane.b32.xlu0 %v720, 16
      %v728 = vpop.permute.xlu0 %727
      %vm731 = vcmask 195712
      %732 = vst.msk [vmem:[#allocation2] sm:$0xff] %vm731, %v726
      %vm733 = vcmask 188544
      %734 = vst.msk [vmem:[#allocation2 + $0x8] sm:$0x1] %vm733, %v728
      %735 = vrot.lane.b32.xlu0 %v326, 104
      %v736 = vpop.permute.xlu0 %735
      %737 = vrot.lane.b32.xlu0 %v326, 72
      %v738 = vpop.permute.xlu0 %737
      %v740 = vsel %vm330, %v736, 0
      %v743 = vsel %vm330, %v738, 0
      %745 = vmatprep.subr.bf16.mxu0 0
      %746 = vmatpush1.bf16.xpose.msra.mxu0 0
      %747 = vmatprep.subr.bf16.mxu0 0
      %748 = vmatpush1.bf16.xpose.msra.mxu0 0
      %749 = vmatprep.subr.bf16.mxu0 0
      %750 = vmatpush1.bf16.xpose.msra.mxu0 0
      %751 = vmatprep.subr.bf16.mxu0 0
      %752 = vmatpush1.bf16.xpose.msra.mxu0 0
      %753 = vmatprep.subr.bf16.mxu0 0
      %754 = vmatpush1.bf16.xpose.msra.mxu0 0
      %755 = vmatprep.subr.bf16.mxu0 0
      %756 = vmatpush1.bf16.xpose.msra.mxu0 0
      %757 = vmatprep.subr.bf16.mxu0 0
      %758 = vmatpush1.bf16.xpose.msra.mxu0 0
      %759 = vmatprep.subr.bf16.mxu0 0
      %760 = vmatpush1.bf16.xpose.msra.mxu0 %v743
      %761 = vmatprep.subr.bf16.mxu0 0
      %762 = vmatpush2.bf16.xpose.msra.mxu0 0
      %763 = vmatprep.subr.bf16.mxu0 0
      %764 = vmatpush2.bf16.xpose.msra.mxu0 0
      %765 = vmatprep.subr.bf16.mxu0 0
      %766 = vmatpush2.bf16.xpose.msra.mxu0 0
      %767 = vmatprep.subr.bf16.mxu0 0
      %768 = vmatpush2.bf16.xpose.msra.mxu0 0
      %769 = vmatprep.subr.bf16.mxu0 0
      %770 = vmatpush2.bf16.xpose.msra.mxu0 0
      %771 = vmatprep.subr.bf16.mxu0 0
      %772 = vmatpush2.bf16.xpose.msra.mxu0 0
      %773 = vmatprep.subr.bf16.mxu0 0
      %774 = vmatpush2.bf16.xpose.msra.mxu0 0
      %775 = vmatprep.subr.bf16.mxu0 0
      %776 = vmatpush2.bf16.xpose.msra.mxu0 0
      %777 = vmatprep.mubr.bf16.mxu0 0
      %778 = vmatmul.mubr.bf16.gmra.mxu0 %v740
      %v779 = vpop.f32.mrf.mxu0
      %v780 = vadd.f32 0.0, %v779
      %v781 = vpop.f32.mrf.mxu0
      %v782 = vpop.f32.mrf.mxu0
      %v783 = vadd.f32 0.0, %v782
      %v784 = vpop.f32.mrf.mxu0
      %785 = vdwg.mxu0
      %v786 = vmul.f32 %v780, 0.35355338
      %v787 = vmul.f32 %v783, 0.35355338
      %v788 = vsel %vm380, %v786, -inf
      %789 = vmax.xlane.f32.xlu0 %v788
      %v790 = vpop.xlane.xlu0 %789
      %v791 = vsel %vm384, %v787, -inf
      %792 = vmax.xlane.f32.xlu0 %v791
      %v793 = vpop.xlane.xlu0 %792
      %v794 = vsub.f32 %v786, %v790
      %v795 = vsub.f32 %v787, %v793
      %v796 = vmul.f32 %v794, 1.442695
      %v797 = vpow.pop %v796
      %v798 = vmul.f32 %v795, 1.442695
      %v799 = vpow.pop %v798
      %v800 = vsel %vm380, %v797, 0.0
      %801 = vadd.xlane.f32.xlu0 %v800
      %v802 = vpop.xlane.xlu0 %801
      %v803 = vsel %vm384, %v799, 0.0
      %804 = vadd.xlane.f32.xlu0 %v803
      %v805 = vpop.xlane.xlu0 %804
      %v806 = vrcp.pop %v802
      %v807 = vrcp.pop %v805
      %v808 = vmul.f32 %v797, %v806
      %v809 = vmul.f32 %v799, %v807
      %v810 = vpack.c.bf16 %v809, %v808
      %811 = vrot.lane.b32.xlu0 %v326, 40
      %v812 = vpop.permute.xlu0 %811
      %v814 = vsel %vm380, %v810, 0
      %v817 = vand.u32 %v812, %v413
      %819 = vmatprep.subr.bf16.mxu0 0
      %820 = vmatpush1.bf16.msra.mxu0 0
      %821 = vmatprep.subr.bf16.mxu0 0
      %822 = vmatpush1.bf16.msra.mxu0 0
      %823 = vmatprep.subr.bf16.mxu0 0
      %824 = vmatpush1.bf16.msra.mxu0 0
      %825 = vmatprep.subr.bf16.mxu0 0
      %826 = vmatpush1.bf16.msra.mxu0 0
      %827 = vmatprep.subr.bf16.mxu0 0
      %828 = vmatpush1.bf16.msra.mxu0 0
      %829 = vmatprep.subr.bf16.mxu0 0
      %830 = vmatpush1.bf16.msra.mxu0 0
      %831 = vmatprep.subr.bf16.mxu0 0
      %832 = vmatpush1.bf16.msra.mxu0 0
      %833 = vmatprep.subr.bf16.mxu0 0
      %834 = vmatpush1.bf16.msra.mxu0 %v817
      %835 = vmatprep.subr.bf16.mxu0 0
      %836 = vmatpush2.bf16.msra.mxu0 0
      %837 = vmatprep.subr.bf16.mxu0 0
      %838 = vmatpush2.bf16.msra.mxu0 0
      %839 = vmatprep.subr.bf16.mxu0 0
      %840 = vmatpush2.bf16.msra.mxu0 0
      %841 = vmatprep.subr.bf16.mxu0 0
      %842 = vmatpush2.bf16.msra.mxu0 0
      %843 = vmatprep.subr.bf16.mxu0 0
      %844 = vmatpush2.bf16.msra.mxu0 0
      %845 = vmatprep.subr.bf16.mxu0 0
      %846 = vmatpush2.bf16.msra.mxu0 0
      %847 = vmatprep.subr.bf16.mxu0 0
      %848 = vmatpush2.bf16.msra.mxu0 0
      %849 = vmatprep.subr.bf16.mxu0 0
      %850 = vmatpush2.bf16.msra.mxu0 0
      %851 = vmatprep.mubr.bf16.mxu0 0
      %852 = vmatmul.mubr.bf16.gmra.mxu0 %v814
      %v853 = vpop.f32.mrf.mxu0
      %v854 = vadd.f32 0.0, %v853
      %v855 = vpop.f32.mrf.mxu0
      %v856 = vpop.f32.mrf.mxu0
      %v857 = vadd.f32 0.0, %v856
      %v858 = vpop.f32.mrf.mxu0
      %859 = vdwg.mxu0
      %862 = vrot.lane.b32.xlu0 %v854, 24
      %v863 = vpop.permute.xlu0 %862
      %864 = vrot.lane.b32.xlu0 %v857, 24
      %v865 = vpop.permute.xlu0 %864
      %vm868 = vcmask 261312
      %869 = vst.msk [vmem:[#allocation2] sm:$0xff] %vm868, %v863
      %vm870 = vcmask 254144
      %871 = vst.msk [vmem:[#allocation2 + $0x8] sm:$0x1] %vm870, %v865
      %v872 = vpack.c.bf16 %v319, %v316
      %874 = vrot.lane.b32.xlu0 %v872, 96
      %v875 = vpop.permute.xlu0 %874
      %v877 = vsel %vm330, %v872, 0
      %v880 = vsel %vm330, %v875, 0
      %882 = vmatprep.subr.bf16.mxu0 0
      %883 = vmatpush1.bf16.xpose.msra.mxu0 0
      %884 = vmatprep.subr.bf16.mxu0 0
      %885 = vmatpush1.bf16.xpose.msra.mxu0 0
      %886 = vmatprep.subr.bf16.mxu0 0
      %887 = vmatpush1.bf16.xpose.msra.mxu0 0
      %888 = vmatprep.subr.bf16.mxu0 0
      %889 = vmatpush1.bf16.xpose.msra.mxu0 0
      %890 = vmatprep.subr.bf16.mxu0 0
      %891 = vmatpush1.bf16.xpose.msra.mxu0 0
      %892 = vmatprep.subr.bf16.mxu0 0
      %893 = vmatpush1.bf16.xpose.msra.mxu0 0
      %894 = vmatprep.subr.bf16.mxu0 0
      %895 = vmatpush1.bf16.xpose.msra.mxu0 0
      %896 = vmatprep.subr.bf16.mxu0 0
      %897 = vmatpush1.bf16.xpose.msra.mxu0 %v880
      %898 = vmatprep.subr.bf16.mxu0 0
      %899 = vmatpush2.bf16.xpose.msra.mxu0 0
      %900 = vmatprep.subr.bf16.mxu0 0
      %901 = vmatpush2.bf16.xpose.msra.mxu0 0
      %902 = vmatprep.subr.bf16.mxu0 0
      %903 = vmatpush2.bf16.xpose.msra.mxu0 0
      %904 = vmatprep.subr.bf16.mxu0 0
      %905 = vmatpush2.bf16.xpose.msra.mxu0 0
      %906 = vmatprep.subr.bf16.mxu0 0
      %907 = vmatpush2.bf16.xpose.msra.mxu0 0
      %908 = vmatprep.subr.bf16.mxu0 0
      %909 = vmatpush2.bf16.xpose.msra.mxu0 0
      %910 = vmatprep.subr.bf16.mxu0 0
      %911 = vmatpush2.bf16.xpose.msra.mxu0 0
      %912 = vmatprep.subr.bf16.mxu0 0
      %913 = vmatpush2.bf16.xpose.msra.mxu0 0
      %914 = vmatprep.mubr.bf16.mxu0 0
      %915 = vmatmul.mubr.bf16.gmra.mxu0 %v877
      %v916 = vpop.f32.mrf.mxu0
      %v917 = vadd.f32 0.0, %v916
      %v918 = vpop.f32.mrf.mxu0
      %v919 = vpop.f32.mrf.mxu0
      %v920 = vadd.f32 0.0, %v919
      %v921 = vpop.f32.mrf.mxu0
      %922 = vdwg.mxu0
      %v923 = vmul.f32 %v917, 0.35355338
      %v924 = vmul.f32 %v920, 0.35355338
      %v925 = vsel %vm380, %v923, -inf
      %926 = vmax.xlane.f32.xlu0 %v925
      %v927 = vpop.xlane.xlu0 %926
      %v928 = vsel %vm384, %v924, -inf
      %929 = vmax.xlane.f32.xlu0 %v928
      %v930 = vpop.xlane.xlu0 %929
      %v931 = vsub.f32 %v923, %v927
      %v932 = vsub.f32 %v924, %v930
      %v933 = vmul.f32 %v931, 1.442695
      %v934 = vpow.pop %v933
      %v935 = vmul.f32 %v932, 1.442695
      %v936 = vpow.pop %v935
      %v937 = vsel %vm380, %v934, 0.0
      %938 = vadd.xlane.f32.xlu0 %v937
      %v939 = vpop.xlane.xlu0 %938
      %v940 = vsel %vm384, %v936, 0.0
      %941 = vadd.xlane.f32.xlu0 %v940
      %v942 = vpop.xlane.xlu0 %941
      %v943 = vrcp.pop %v939
      %v944 = vrcp.pop %v942
      %v945 = vmul.f32 %v934, %v943
      %v946 = vmul.f32 %v936, %v944
      %v947 = vpack.c.bf16 %v946, %v945
      %948 = vrot.lane.b32.xlu0 %v872, 64
      %v949 = vpop.permute.xlu0 %948
      %v951 = vsel %vm380, %v947, 0
      %v954 = vand.u32 %v949, %v413
      %956 = vmatprep.subr.bf16.mxu0 0
      %957 = vmatpush1.bf16.msra.mxu0 0
      %958 = vmatprep.subr.bf16.mxu0 0
      %959 = vmatpush1.bf16.msra.mxu0 0
      %960 = vmatprep.subr.bf16.mxu0 0
      %961 = vmatpush1.bf16.msra.mxu0 0
      %962 = vmatprep.subr.bf16.mxu0 0
      %963 = vmatpush1.bf16.msra.mxu0 0
      %964 = vmatprep.subr.bf16.mxu0 0
      %965 = vmatpush1.bf16.msra.mxu0 0
      %966 = vmatprep.subr.bf16.mxu0 0
      %967 = vmatpush1.bf16.msra.mxu0 0
      %968 = vmatprep.subr.bf16.mxu0 0
      %969 = vmatpush1.bf16.msra.mxu0 0
      %970 = vmatprep.subr.bf16.mxu0 0
      %971 = vmatpush1.bf16.msra.mxu0 %v954
      %972 = vmatprep.subr.bf16.mxu0 0
      %973 = vmatpush2.bf16.msra.mxu0 0
      %974 = vmatprep.subr.bf16.mxu0 0
      %975 = vmatpush2.bf16.msra.mxu0 0
      %976 = vmatprep.subr.bf16.mxu0 0
      %977 = vmatpush2.bf16.msra.mxu0 0
      %978 = vmatprep.subr.bf16.mxu0 0
      %979 = vmatpush2.bf16.msra.mxu0 0
      %980 = vmatprep.subr.bf16.mxu0 0
      %981 = vmatpush2.bf16.msra.mxu0 0
      %982 = vmatprep.subr.bf16.mxu0 0
      %983 = vmatpush2.bf16.msra.mxu0 0
      %984 = vmatprep.subr.bf16.mxu0 0
      %985 = vmatpush2.bf16.msra.mxu0 0
      %986 = vmatprep.subr.bf16.mxu0 0
      %987 = vmatpush2.bf16.msra.mxu0 0
      %988 = vmatprep.mubr.bf16.mxu0 0
      %989 = vmatmul.mubr.bf16.gmra.mxu0 %v951
      %v990 = vpop.f32.mrf.mxu0
      %v991 = vadd.f32 0.0, %v990
      %v992 = vpop.f32.mrf.mxu0
      %v993 = vpop.f32.mrf.mxu0
      %v994 = vadd.f32 0.0, %v993
      %v995 = vpop.f32.mrf.mxu0
      %996 = vdwg.mxu0
      %997 = vst.msk [vmem:[#allocation2 + $0x10] sm:$0xff] %vm330, %v991
      %998 = vst.msk [vmem:[#allocation2 + $0x18] sm:$0x1] %vm459, %v994
      %999 = vrot.lane.b32.xlu0 %v872, 120
      %v1000 = vpop.permute.xlu0 %999
      %1001 = vrot.lane.b32.xlu0 %v872, 88
      %v1002 = vpop.permute.xlu0 %1001
      %v1004 = vsel %vm330, %v1000, 0
      %v1007 = vsel %vm330, %v1002, 0
      %1009 = vmatprep.subr.bf16.mxu0 0
      %1010 = vmatpush1.bf16.xpose.msra.mxu0 0
      %1011 = vmatprep.subr.bf16.mxu0 0
      %1012 = vmatpush1.bf16.xpose.msra.mxu0 0
      %1013 = vmatprep.subr.bf16.mxu0 0
      %1014 = vmatpush1.bf16.xpose.msra.mxu0 0
      %1015 = vmatprep.subr.bf16.mxu0 0
      %1016 = vmatpush1.bf16.xpose.msra.mxu0 0
      %1017 = vmatprep.subr.bf16.mxu0 0
      %1018 = vmatpush1.bf16.xpose.msra.mxu0 0
      %1019 = vmatprep.subr.bf16.mxu0 0
      %1020 = vmatpush1.bf16.xpose.msra.mxu0 0
      %1021 = vmatprep.subr.bf16.mxu0 0
      %1022 = vmatpush1.bf16.xpose.msra.mxu0 0
      %1023 = vmatprep.subr.bf16.mxu0 0
      %1024 = vmatpush1.bf16.xpose.msra.mxu0 %v1007
      %1025 = vmatprep.subr.bf16.mxu0 0
      %1026 = vmatpush2.bf16.xpose.msra.mxu0 0
      %1027 = vmatprep.subr.bf16.mxu0 0
      %1028 = vmatpush2.bf16.xpose.msra.mxu0 0
      %1029 = vmatprep.subr.bf16.mxu0 0
      %1030 = vmatpush2.bf16.xpose.msra.mxu0 0
      %1031 = vmatprep.subr.bf16.mxu0 0
      %1032 = vmatpush2.bf16.xpose.msra.mxu0 0
      %1033 = vmatprep.subr.bf16.mxu0 0
      %1034 = vmatpush2.bf16.xpose.msra.mxu0 0
      %1035 = vmatprep.subr.bf16.mxu0 0
      %1036 = vmatpush2.bf16.xpose.msra.mxu0 0
      %1037 = vmatprep.subr.bf16.mxu0 0
      %1038 = vmatpush2.bf16.xpose.msra.mxu0 0
      %1039 = vmatprep.subr.bf16.mxu0 0
      %1040 = vmatpush2.bf16.xpose.msra.mxu0 0
      %1041 = vmatprep.mubr.bf16.mxu0 0
      %1042 = vmatmul.mubr.bf16.gmra.mxu0 %v1004
      %v1043 = vpop.f32.mrf.mxu0
      %v1044 = vadd.f32 0.0, %v1043
      %v1045 = vpop.f32.mrf.mxu0
      %v1046 = vpop.f32.mrf.mxu0
      %v1047 = vadd.f32 0.0, %v1046
      %v1048 = vpop.f32.mrf.mxu0
      %1049 = vdwg.mxu0
      %v1050 = vmul.f32 %v1044, 0.35355338
      %v1051 = vmul.f32 %v1047, 0.35355338
      %v1052 = vsel %vm380, %v1050, -inf
      %1053 = vmax.xlane.f32.xlu0 %v1052
      %v1054 = vpop.xlane.xlu0 %1053
      %v1055 = vsel %vm384, %v1051, -inf
      %1056 = vmax.xlane.f32.xlu0 %v1055
      %v1057 = vpop.xlane.xlu0 %1056
      %v1058 = vsub.f32 %v1050, %v1054
      %v1059 = vsub.f32 %v1051, %v1057
      %v1060 = vmul.f32 %v1058, 1.442695
      %v1061 = vpow.pop %v1060
      %v1062 = vmul.f32 %v1059, 1.442695
      %v1063 = vpow.pop %v1062
      %v1064 = vsel %vm380, %v1061, 0.0
      %1065 = vadd.xlane.f32.xlu0 %v1064
      %v1066 = vpop.xlane.xlu0 %1065
      %v1067 = vsel %vm384, %v1063, 0.0
      %1068 = vadd.xlane.f32.xlu0 %v1067
      %v1069 = vpop.xlane.xlu0 %1068
      %v1070 = vrcp.pop %v1066
      %v1071 = vrcp.pop %v1069
      %v1072 = vmul.f32 %v1061, %v1070
      %v1073 = vmul.f32 %v1063, %v1071
      %v1074 = vpack.c.bf16 %v1073, %v1072
      %1075 = vrot.lane.b32.xlu0 %v872, 56
      %v1076 = vpop.permute.xlu0 %1075
      %v1078 = vsel %vm380, %v1074, 0
      %v1081 = vand.u32 %v1076, %v413
      %1083 = vmatprep.subr.bf16.mxu0 0
      %1084 = vmatpush1.bf16.msra.mxu0 0
      %1085 = vmatprep.subr.bf16.mxu0 0
      %1086 = vmatpush1.bf16.msra.mxu0 0
      %1087 = vmatprep.subr.bf16.mxu0 0
      %1088 = vmatpush1.bf16.msra.mxu0 0
      %1089 = vmatprep.subr.bf16.mxu0 0
      %1090 = vmatpush1.bf16.msra.mxu0 0
      %1091 = vmatprep.subr.bf16.mxu0 0
      %1092 = vmatpush1.bf16.msra.mxu0 0
      %1093 = vmatprep.subr.bf16.mxu0 0
      %1094 = vmatpush1.bf16.msra.mxu0 0
      %1095 = vmatprep.subr.bf16.mxu0 0
      %1096 = vmatpush1.bf16.msra.mxu0 0
      %1097 = vmatprep.subr.bf16.mxu0 0
      %1098 = vmatpush1.bf16.msra.mxu0 %v1081
      %1099 = vmatprep.subr.bf16.mxu0 0
      %1100 = vmatpush2.bf16.msra.mxu0 0
      %1101 = vmatprep.subr.bf16.mxu0 0
      %1102 = vmatpush2.bf16.msra.mxu0 0
      %1103 = vmatprep.subr.bf16.mxu0 0
      %1104 = vmatpush2.bf16.msra.mxu0 0
      %1105 = vmatprep.subr.bf16.mxu0 0
      %1106 = vmatpush2.bf16.msra.mxu0 0
      %1107 = vmatprep.subr.bf16.mxu0 0
      %1108 = vmatpush2.bf16.msra.mxu0 0
      %1109 = vmatprep.subr.bf16.mxu0 0
      %1110 = vmatpush2.bf16.msra.mxu0 0
      %1111 = vmatprep.subr.bf16.mxu0 0
      %1112 = vmatpush2.bf16.msra.mxu0 0
      %1113 = vmatprep.subr.bf16.mxu0 0
      %1114 = vmatpush2.bf16.msra.mxu0 0
      %1115 = vmatprep.mubr.bf16.mxu0 0
      %1116 = vmatmul.mubr.bf16.gmra.mxu0 %v1078
      %v1117 = vpop.f32.mrf.mxu0
      %v1118 = vadd.f32 0.0, %v1117
      %v1119 = vpop.f32.mrf.mxu0
      %v1120 = vpop.f32.mrf.mxu0
      %v1121 = vadd.f32 0.0, %v1120
      %v1122 = vpop.f32.mrf.mxu0
      %1123 = vdwg.mxu0
      %1126 = vrot.lane.b32.xlu0 %v1118, 8
      %v1127 = vpop.permute.xlu0 %1126
      %1128 = vrot.lane.b32.xlu0 %v1121, 8
      %v1129 = vpop.permute.xlu0 %1128
      %1132 = vst.msk [vmem:[#allocation2 + $0x10] sm:$0xff] %vm594, %v1127
      %1133 = vst.msk [vmem:[#allocation2 + $0x18] sm:$0x1] %vm596, %v1129
      %1134 = vrot.lane.b32.xlu0 %v872, 112
      %v1135 = vpop.permute.xlu0 %1134
      %1136 = vrot.lane.b32.xlu0 %v872, 80
      %v1137 = vpop.permute.xlu0 %1136
      %v1139 = vsel %vm330, %v1135, 0
      %v1142 = vsel %vm330, %v1137, 0
      %1144 = vmatprep.subr.bf16.mxu0 0
      %1145 = vmatpush1.bf16.xpose.msra.mxu0 0
      %1146 = vmatprep.subr.bf16.mxu0 0
      %1147 = vmatpush1.bf16.xpose.msra.mxu0 0
      %1148 = vmatprep.subr.bf16.mxu0 0
      %1149 = vmatpush1.bf16.xpose.msra.mxu0 0
      %1150 = vmatprep.subr.bf16.mxu0 0
      %1151 = vmatpush1.bf16.xpose.msra.mxu0 0
      %1152 = vmatprep.subr.bf16.mxu0 0
      %1153 = vmatpush1.bf16.xpose.msra.mxu0 0
      %1154 = vmatprep.subr.bf16.mxu0 0
      %1155 = vmatpush1.bf16.xpose.msra.mxu0 0
      %1156 = vmatprep.subr.bf16.mxu0 0
      %1157 = vmatpush1.bf16.xpose.msra.mxu0 0
      %1158 = vmatprep.subr.bf16.mxu0 0
      %1159 = vmatpush1.bf16.xpose.msra.mxu0 %v1142
      %1160 = vmatprep.subr.bf16.mxu0 0
      %1161 = vmatpush2.bf16.xpose.msra.mxu0 0
      %1162 = vmatprep.subr.bf16.mxu0 0
      %1163 = vmatpush2.bf16.xpose.msra.mxu0 0
      %1164 = vmatprep.subr.bf16.mxu0 0
      %1165 = vmatpush2.bf16.xpose.msra.mxu0 0
      %1166 = vmatprep.subr.bf16.mxu0 0
      %1167 = vmatpush2.bf16.xpose.msra.mxu0 0
      %1168 = vmatprep.subr.bf16.mxu0 0
      %1169 = vmatpush2.bf16.xpose.msra.mxu0 0
      %1170 = vmatprep.subr.bf16.mxu0 0
      %1171 = vmatpush2.bf16.xpose.msra.mxu0 0
      %1172 = vmatprep.subr.bf16.mxu0 0
      %1173 = vmatpush2.bf16.xpose.msra.mxu0 0
      %1174 = vmatprep.subr.bf16.mxu0 0
      %1175 = vmatpush2.bf16.xpose.msra.mxu0 0
      %1176 = vmatprep.mubr.bf16.mxu0 0
      %1177 = vmatmul.mubr.bf16.gmra.mxu0 %v1139
      %v1178 = vpop.f32.mrf.mxu0
      %v1179 = vadd.f32 0.0, %v1178
      %v1180 = vpop.f32.mrf.mxu0
      %v1181 = vpop.f32.mrf.mxu0
      %v1182 = vadd.f32 0.0, %v1181
      %v1183 = vpop.f32.mrf.mxu0
      %1184 = vdwg.mxu0
      %v1185 = vmul.f32 %v1179, 0.35355338
      %v1186 = vmul.f32 %v1182, 0.35355338
      %v1187 = vsel %vm380, %v1185, -inf
      %1188 = vmax.xlane.f32.xlu0 %v1187
      %v1189 = vpop.xlane.xlu0 %1188
      %v1190 = vsel %vm384, %v1186, -inf
      %1191 = vmax.xlane.f32.xlu0 %v1190
      %v1192 = vpop.xlane.xlu0 %1191
      %v1193 = vsub.f32 %v1185, %v1189
      %v1194 = vsub.f32 %v1186, %v1192
      %v1195 = vmul.f32 %v1193, 1.442695
      %v1196 = vpow.pop %v1195
      %v1197 = vmul.f32 %v1194, 1.442695
      %v1198 = vpow.pop %v1197
      %v1199 = vsel %vm380, %v1196, 0.0
      %1200 = vadd.xlane.f32.xlu0 %v1199
      %v1201 = vpop.xlane.xlu0 %1200
      %v1202 = vsel %vm384, %v1198, 0.0
      %1203 = vadd.xlane.f32.xlu0 %v1202
      %v1204 = vpop.xlane.xlu0 %1203
      %v1205 = vrcp.pop %v1201
      %v1206 = vrcp.pop %v1204
      %v1207 = vmul.f32 %v1196, %v1205
      %v1208 = vmul.f32 %v1198, %v1206
      %v1209 = vpack.c.bf16 %v1208, %v1207
      %1210 = vrot.lane.b32.xlu0 %v872, 48
      %v1211 = vpop.permute.xlu0 %1210
      %v1213 = vsel %vm380, %v1209, 0
      %v1216 = vand.u32 %v1211, %v413
      %1218 = vmatprep.subr.bf16.mxu0 0
      %1219 = vmatpush1.bf16.msra.mxu0 0
      %1220 = vmatprep.subr.bf16.mxu0 0
      %1221 = vmatpush1.bf16.msra.mxu0 0
      %1222 = vmatprep.subr.bf16.mxu0 0
      %1223 = vmatpush1.bf16.msra.mxu0 0
      %1224 = vmatprep.subr.bf16.mxu0 0
      %1225 = vmatpush1.bf16.msra.mxu0 0
      %1226 = vmatprep.subr.bf16.mxu0 0
      %1227 = vmatpush1.bf16.msra.mxu0 0
      %1228 = vmatprep.subr.bf16.mxu0 0
      %1229 = vmatpush1.bf16.msra.mxu0 0
      %1230 = vmatprep.subr.bf16.mxu0 0
      %1231 = vmatpush1.bf16.msra.mxu0 0
      %1232 = vmatprep.subr.bf16.mxu0 0
      %1233 = vmatpush1.bf16.msra.mxu0 %v1216
      %1234 = vmatprep.subr.bf16.mxu0 0
      %1235 = vmatpush2.bf16.msra.mxu0 0
      %1236 = vmatprep.subr.bf16.mxu0 0
      %1237 = vmatpush2.bf16.msra.mxu0 0
      %1238 = vmatprep.subr.bf16.mxu0 0
      %1239 = vmatpush2.bf16.msra.mxu0 0
      %1240 = vmatprep.subr.bf16.mxu0 0
      %1241 = vmatpush2.bf16.msra.mxu0 0
      %1242 = vmatprep.subr.bf16.mxu0 0
      %1243 = vmatpush2.bf16.msra.mxu0 0
      %1244 = vmatprep.subr.bf16.mxu0 0
      %1245 = vmatpush2.bf16.msra.mxu0 0
      %1246 = vmatprep.subr.bf16.mxu0 0
      %1247 = vmatpush2.bf16.msra.mxu0 0
      %1248 = vmatprep.subr.bf16.mxu0 0
      %1249 = vmatpush2.bf16.msra.mxu0 0
      %1250 = vmatprep.mubr.bf16.mxu0 0
      %1251 = vmatmul.mubr.bf16.gmra.mxu0 %v1213
      %v1252 = vpop.f32.mrf.mxu0
      %v1253 = vadd.f32 0.0, %v1252
      %v1254 = vpop.f32.mrf.mxu0
      %v1255 = vpop.f32.mrf.mxu0
      %v1256 = vadd.f32 0.0, %v1255
      %v1257 = vpop.f32.mrf.mxu0
      %1258 = vdwg.mxu0
      %1261 = vrot.lane.b32.xlu0 %v1253, 16
      %v1262 = vpop.permute.xlu0 %1261
      %1263 = vrot.lane.b32.xlu0 %v1256, 16
      %v1264 = vpop.permute.xlu0 %1263
      %1267 = vst.msk [vmem:[#allocation2 + $0x10] sm:$0xff] %vm731, %v1262
      %1268 = vst.msk [vmem:[#allocation2 + $0x18] sm:$0x1] %vm733, %v1264
      %1269 = vrot.lane.b32.xlu0 %v872, 104
      %v1270 = vpop.permute.xlu0 %1269
      %1271 = vrot.lane.b32.xlu0 %v872, 72
      %v1272 = vpop.permute.xlu0 %1271
      %v1274 = vsel %vm330, %v1270, 0
      %v1277 = vsel %vm330, %v1272, 0
      %1279 = vmatprep.subr.bf16.mxu0 0
      %1280 = vmatpush1.bf16.xpose.msra.mxu0 0
      %1281 = vmatprep.subr.bf16.mxu0 0
      %1282 = vmatpush1.bf16.xpose.msra.mxu0 0
      %1283 = vmatprep.subr.bf16.mxu0 0
      %1284 = vmatpush1.bf16.xpose.msra.mxu0 0
      %1285 = vmatprep.subr.bf16.mxu0 0
      %1286 = vmatpush1.bf16.xpose.msra.mxu0 0
      %1287 = vmatprep.subr.bf16.mxu0 0
      %1288 = vmatpush1.bf16.xpose.msra.mxu0 0
      %1289 = vmatprep.subr.bf16.mxu0 0
      %1290 = vmatpush1.bf16.xpose.msra.mxu0 0
      %1291 = vmatprep.subr.bf16.mxu0 0
      %1292 = vmatpush1.bf16.xpose.msra.mxu0 0
      %1293 = vmatprep.subr.bf16.mxu0 0
      %1294 = vmatpush1.bf16.xpose.msra.mxu0 %v1277
      %1295 = vmatprep.subr.bf16.mxu0 0
      %1296 = vmatpush2.bf16.xpose.msra.mxu0 0
      %1297 = vmatprep.subr.bf16.mxu0 0
      %1298 = vmatpush2.bf16.xpose.msra.mxu0 0
      %1299 = vmatprep.subr.bf16.mxu0 0
      %1300 = vmatpush2.bf16.xpose.msra.mxu0 0
      %1301 = vmatprep.subr.bf16.mxu0 0
      %1302 = vmatpush2.bf16.xpose.msra.mxu0 0
      %1303 = vmatprep.subr.bf16.mxu0 0
      %1304 = vmatpush2.bf16.xpose.msra.mxu0 0
      %1305 = vmatprep.subr.bf16.mxu0 0
      %1306 = vmatpush2.bf16.xpose.msra.mxu0 0
      %1307 = vmatprep.subr.bf16.mxu0 0
      %1308 = vmatpush2.bf16.xpose.msra.mxu0 0
      %1309 = vmatprep.subr.bf16.mxu0 0
      %1310 = vmatpush2.bf16.xpose.msra.mxu0 0
      %1311 = vmatprep.mubr.bf16.mxu0 0
      %1312 = vmatmul.mubr.bf16.gmra.mxu0 %v1274
      %v1313 = vpop.f32.mrf.mxu0
      %v1314 = vadd.f32 0.0, %v1313
      %v1315 = vpop.f32.mrf.mxu0
      %v1316 = vpop.f32.mrf.mxu0
      %v1317 = vadd.f32 0.0, %v1316
      %v1318 = vpop.f32.mrf.mxu0
      %1319 = vdwg.mxu0
      %v1320 = vmul.f32 %v1314, 0.35355338
      %v1321 = vmul.f32 %v1317, 0.35355338
      %v1322 = vsel %vm380, %v1320, -inf
      %1323 = vmax.xlane.f32.xlu0 %v1322
      %v1324 = vpop.xlane.xlu0 %1323
      %v1325 = vsel %vm384, %v1321, -inf
      %1326 = vmax.xlane.f32.xlu0 %v1325
      %v1327 = vpop.xlane.xlu0 %1326
      %v1328 = vsub.f32 %v1320, %v1324
      %v1329 = vsub.f32 %v1321, %v1327
      %v1330 = vmul.f32 %v1328, 1.442695
      %v1331 = vpow.pop %v1330
      %v1332 = vmul.f32 %v1329, 1.442695
      %v1333 = vpow.pop %v1332
      %v1334 = vsel %vm380, %v1331, 0.0
      %1335 = vadd.xlane.f32.xlu0 %v1334
      %v1336 = vpop.xlane.xlu0 %1335
      %v1337 = vsel %vm384, %v1333, 0.0
      %1338 = vadd.xlane.f32.xlu0 %v1337
      %v1339 = vpop.xlane.xlu0 %1338
      %v1340 = vrcp.pop %v1336
      %v1341 = vrcp.pop %v1339
      %v1342 = vmul.f32 %v1331, %v1340
      %v1343 = vmul.f32 %v1333, %v1341
      %v1344 = vpack.c.bf16 %v1343, %v1342
      %1345 = vrot.lane.b32.xlu0 %v872, 40
      %v1346 = vpop.permute.xlu0 %1345
      %v1348 = vsel %vm380, %v1344, 0
      %v1351 = vand.u32 %v1346, %v413
      %1353 = vmatprep.subr.bf16.mxu0 0
      %1354 = vmatpush1.bf16.msra.mxu0 0
      %1355 = vmatprep.subr.bf16.mxu0 0
      %1356 = vmatpush1.bf16.msra.mxu0 0
      %1357 = vmatprep.subr.bf16.mxu0 0
      %1358 = vmatpush1.bf16.msra.mxu0 0
      %1359 = vmatprep.subr.bf16.mxu0 0
      %1360 = vmatpush1.bf16.msra.mxu0 0
      %1361 = vmatprep.subr.bf16.mxu0 0
      %1362 = vmatpush1.bf16.msra.mxu0 0
      %1363 = vmatprep.subr.bf16.mxu0 0
      %1364 = vmatpush1.bf16.msra.mxu0 0
      %1365 = vmatprep.subr.bf16.mxu0 0
      %1366 = vmatpush1.bf16.msra.mxu0 0
      %1367 = vmatprep.subr.bf16.mxu0 0
      %1368 = vmatpush1.bf16.msra.mxu0 %v1351
      %1369 = vmatprep.subr.bf16.mxu0 0
      %1370 = vmatpush2.bf16.msra.mxu0 0
      %1371 = vmatprep.subr.bf16.mxu0 0
      %1372 = vmatpush2.bf16.msra.mxu0 0
      %1373 = vmatprep.subr.bf16.mxu0 0
      %1374 = vmatpush2.bf16.msra.mxu0 0
      %1375 = vmatprep.subr.bf16.mxu0 0
      %1376 = vmatpush2.bf16.msra.mxu0 0
      %1377 = vmatprep.subr.bf16.mxu0 0
      %1378 = vmatpush2.bf16.msra.mxu0 0
      %1379 = vmatprep.subr.bf16.mxu0 0
      %1380 = vmatpush2.bf16.msra.mxu0 0
      %1381 = vmatprep.subr.bf16.mxu0 0
      %1382 = vmatpush2.bf16.msra.mxu0 0
      %1383 = vmatprep.subr.bf16.mxu0 0
      %1384 = vmatpush2.bf16.msra.mxu0 0
      %1385 = vmatprep.mubr.bf16.mxu0 0
      %1386 = vmatmul.mubr.bf16.gmra.mxu0 %v1348
      %v1387 = vpop.f32.mrf.mxu0
      %v1388 = vadd.f32 0.0, %v1387
      %v1389 = vpop.f32.mrf.mxu0
      %v1390 = vpop.f32.mrf.mxu0
      %v1391 = vadd.f32 0.0, %v1390
      %v1392 = vpop.f32.mrf.mxu0
      %1393 = vdwg.mxu0
      %1396 = vrot.lane.b32.xlu0 %v1388, 24
      %v1397 = vpop.permute.xlu0 %1396
      %1398 = vrot.lane.b32.xlu0 %v1391, 24
      %v1399 = vpop.permute.xlu0 %1398
      %1402 = vst.msk [vmem:[#allocation2 + $0x10] sm:$0xff] %vm868, %v1397
      %1403 = vst.msk [vmem:[#allocation2 + $0x18] sm:$0x1] %vm870, %v1399
      %v1404 = vld [vmem:[#allocation2] sm:$0xff]
      %v1405 = vld [vmem:[#allocation2 + $0x8] sm:$0xff]
      %v1406 = vld [vmem:[#allocation2 + $0x10] sm:$0xff]
      %v1407 = vld [vmem:[#allocation2 + $0x18] sm:$0xff]
      %v1408 = vpack.c.bf16 %v1405, %v1404
      %v1409 = vpack.c.bf16 %v1407, %v1406
      %v1410 = vld [vmem:[%s3] sm:$0xf]
      %v1411 = vld [vmem:[%s3 + $0x4] sm:$0xf]
      %v1412 = vld [vmem:[%s3 + $0x8] sm:$0xf]
      %v1413 = vld [vmem:[%s3 + $0xc] sm:$0xf]
      %v1414 = vld [vmem:[%s4] sm:$0x1]
      %v1416 = vlaneseq
      %v1417 = vshrl.u32 %v1416, 7
      %v1418 = vsub.s32 0, %v1417
      %v1419 = vrot.slane %v1414, %v1418
      %v1425 = vunpack.c.l.b16 %v1410
      %v1426 = vunpack.c.l.b16 %v1411
      %v1427 = vunpack.c.l.b16 %v1412
      %v1428 = vunpack.c.l.b16 %v1413
      %v1429 = vpack.c.b16 %v1426, %v1425
      %v1430 = vpack.c.b16 %v1428, %v1427
      %v1434 = vsel %vm266, %v1408, 0
      %v1437 = vsel %vm266, %v1409, 0
      %1439 = vmatprep.subr.bf16.mxu0 0
      %1440 = vmatpush1.bf16.msra.mxu0 0
      %1441 = vmatprep.subr.bf16.mxu0 0
      %1442 = vmatpush1.bf16.msra.mxu0 0
      %1443 = vmatprep.subr.bf16.mxu0 0
      %1444 = vmatpush1.bf16.msra.mxu0 0
      %1445 = vmatprep.subr.bf16.mxu0 0
      %1446 = vmatpush1.bf16.msra.mxu0 0
      %1447 = vmatprep.subr.bf16.mxu0 0
      %1448 = vmatpush1.bf16.msra.mxu0 0
      %1449 = vmatprep.subr.bf16.mxu0 0
      %1450 = vmatpush1.bf16.msra.mxu0 0
      %1451 = vmatprep.subr.bf16.mxu0 0
      %1452 = vmatpush1.bf16.msra.mxu0 %v1430
      %1453 = vmatprep.subr.bf16.mxu0 0
      %1454 = vmatpush1.bf16.msra.mxu0 %v1429
      %1455 = vmatprep.subr.bf16.mxu0 0
      %1456 = vmatpush2.bf16.msra.mxu0 0
      %1457 = vmatprep.subr.bf16.mxu0 0
      %1458 = vmatpush2.bf16.msra.mxu0 0
      %1459 = vmatprep.subr.bf16.mxu0 0
      %1460 = vmatpush2.bf16.msra.mxu0 0
      %1461 = vmatprep.subr.bf16.mxu0 0
      %1462 = vmatpush2.bf16.msra.mxu0 0
      %1463 = vmatprep.subr.bf16.mxu0 0
      %1464 = vmatpush2.bf16.msra.mxu0 0
      %1465 = vmatprep.subr.bf16.mxu0 0
      %1466 = vmatpush2.bf16.msra.mxu0 0
      %1467 = vmatprep.subr.bf16.mxu0 0
      %1468 = vmatpush2.bf16.msra.mxu0 0
      %1469 = vmatprep.subr.bf16.mxu0 0
      %1470 = vmatpush2.bf16.msra.mxu0 0
      %1471 = vmatprep.mubr.bf16.mxu0 0
      %1472 = vmatmul.mubr.bf16.gmra.mxu0 %v1434
      %v1473 = vpop.f32.mrf.mxu0
      %v1474 = vadd.f32 %v1419, %v1473
      %v1475 = vpop.f32.mrf.mxu0
      %v1476 = vpop.f32.mrf.mxu0
      %v1477 = vadd.f32 %v1419, %v1476
      %v1478 = vpop.f32.mrf.mxu0
      %1479 = vmatprep.mubr.bf16.mxu0 0
      %1480 = vmatmul.mubr.bf16.gmra.mxu0 %v1437
      %v1481 = vpop.f32.mrf.mxu0
      %v1482 = vadd.f32 %v1419, %v1481
      %v1483 = vpop.f32.mrf.mxu0
      %v1484 = vpop.f32.mrf.mxu0
      %v1485 = vadd.f32 %v1419, %v1484
      %v1486 = vpop.f32.mrf.mxu0
      %1487 = vdwg.mxu0
      %1488 = vst.msk [vmem:[%s226] sm:$0xff] %vm266, %v1474
      %1489 = vst.msk [vmem:[%s226 + $0x8] sm:$0xff] %vm266, %v1477
      %1490 = vst.msk [vmem:[%s226 + $0x10] sm:$0xff] %vm266, %v1482
      %1491 = vst.msk [vmem:[%s226 + $0x18] sm:$0xff] %vm266, %v1485
      %s1492 = smul.u32 4, %s16
      %p1493 = scmp.lt.s32.totalorder %s1492, 7
      %s1494 = scalar_select %p1493, %s1492, 7
      %s1495 = smul.addr %s1494, 8
      %s1496 = scalar_lea.vmem %s5, %s1495
      // Predicated region
      $region41: #{tpu_custom_call.1} parent=39 // pred_check
        %p1497 = pneg %p144
      $region42: #{tpu_custom_call.1} parent=39 // pred_check_branch
        %1499 = sbr.rel (%p1497) target = $region44
      $region43: #{tpu_custom_call.1} parent=39 // pred_region
        %s1500 = smul.u32 4, %s16
      $region44: #{tpu_custom_call.1} parent=39 // pred_fallthru
        _
    $region40: #{tpu_custom_call.1} parent=5 // pred_fallthru
      _
    %p1501 = scmp.le.s32.totalorder 2, %s11
    // Predicated region
    $region45: #{tpu_custom_call.1} parent=5 // pred_check
      %p1502 = pneg %p1501
    $region46: #{tpu_custom_call.1} parent=5 // pred_check_branch
      %1504 = sbr.rel (%p1502) target = $region48
    $region47: #{tpu_custom_call.1} parent=5 // pred_region
      %s1505 = ssub.s32 %s11, 2
      // Predicated region
      $region49: #{tpu_custom_call.1} parent=47 // pred_check
        %p1506 = pneg %p150
      $region50: #{tpu_custom_call.1} parent=47 // pred_check_branch
        %1508 = sbr.rel (%p1506) target = $region52
      $region51: #{tpu_custom_call.1} parent=47 // pred_region
        %s1509 = smul.u32 4, %s17
        %p1510 = scmp.lt.s32.totalorder %s1509, 7
        %s1511 = scalar_select %p1510, %s1509, 7
        %s1512 = smul.addr %s1511, 8
        %s1513 = scalar_lea.vmem %s5, %s1512
      $region52: #{tpu_custom_call.1} parent=47 // pred_fallthru
        _
    $region48: #{tpu_custom_call.1} parent=5 // pred_fallthru
      _
  $region6: #{tpu_custom_call.1} parent=0 // loop_footer
    %s15 = sadd.s32 1, %s11
  $region7: #{tpu_custom_call.1} parent=0 // loop_footer_branch
    %10 = sbr.rel target = $region3
  $region8: #{tpu_custom_call.1} parent=0 // loop_exit
    _

</llo_original>
